<compile_context>
chip_gen: v6e
topology: v6e:2x2x1
jax: 0.10.0
libtpu: 0.0.40
codegen_flags: <defaults>
</compile_context>

<pallas_src>
import functools

import jax
import jax.numpy as jnp
from jax.experimental import pallas as pl
from jax.experimental.pallas import tpu as pltpu  # noqa: F401  (TPU backend)


def _fused_cnn_kernel(x_ref, mask_ref, w1_ref, b1_ref, w2_ref, b2_ref,
                      w3_ref, b3_ref, o_ref, *, H, W, N):
    """Fused 3-layer CNN on flattened, zero-bordered activation slabs.

    x_ref    : (Cin_pad, M)  with M = N*(H+2)*(W+2); border positions are 0
    mask_ref : (1, M)        1.0 at interior positions, 0.0 at border
    w*_ref   : (Cout, 9*Cin) im2col-reshaped 3x3 weights
    b*_ref   : (Cout, 1)
    o_ref    : (1, M)        sigmoid output over the padded grid (border junk
                             is sliced off in the wrapper)
    """
    Wp = W + 2
    P = (H + 2) * Wp
    M = N * P
    mask = mask_ref[...]                                   # (1, M)

    def shift_lanes(a, off):
        # a[:, q] -> a[:, (q + off) mod M]. Wrapped values only ever land on
        # border positions, which are masked (layers 1-2) or discarded (out).
        s = off % M
        if s == 0:
            return a
        return jnp.concatenate([a[:, s:], a[:, :s]], axis=1)

    def conv3x3(a, w, b):
        # a: (Cin, M) zero-bordered slab; w: (Cout, 9*Cin); b: (Cout, 1)
        taps = [shift_lanes(a, (dh - 1) * Wp + (dw - 1))
                for dh in range(3) for dw in range(3)]
        patches = jnp.concatenate(taps, axis=0)            # (9*Cin, M)
        return jnp.dot(w, patches,
                       preferred_element_type=jnp.float32) + b

    x = x_ref[...]
    h1 = jnp.maximum(conv3x3(x, w1_ref[...], b1_ref[...]), 0.0) * mask
    h2 = jnp.maximum(conv3x3(h1, w2_ref[...], b2_ref[...]), 0.0) * mask
    y = jax.nn.sigmoid(conv3x3(h2, w3_ref[...], b3_ref[...]))
    o_ref[...] = y                                         # lane-dense store


def _prep_weight(w, cin_pad=None):
    """(3, 3, Cin, Cout) HWIO -> (Cout, 9*cin_pad) im2col layout."""
    kh, kw, cin, cout = w.shape
    cin_pad = cin if cin_pad is None else cin_pad
    if cin_pad > cin:
        w = jnp.pad(w, ((0, 0), (0, 0), (0, cin_pad - cin), (0, 0)))
    return (w.reshape(kh * kw, cin_pad, cout)
             .transpose(2, 0, 1)
             .reshape(cout, kh * kw * cin_pad))


@jax.jit
def simpler_cnn_forward(x_nchw, params):
    """Forward pass matching SimplerCNN: NCHW in, NCHW out (N, 1, H, W)."""
    N, Cin, H, W = x_nchw.shape
    Hp, Wp = H + 2, W + 2
    P = Hp * Wp
    M = N * P
    cin_pad = ((Cin + 7) // 8) * 8           # align channel concat to sublanes

    # Input prep (tiny, fused XLA ops): NCHW -> channel-major, spatially
    # zero-padded, flattened slab (cin_pad, M).
    x = jnp.transpose(x_nchw, (1, 0, 2, 3))                     # (C, N, H, W)
    x = jnp.pad(x, ((0, cin_pad - Cin), (0, 0), (1, 1), (1, 1)))
    x_flat = x.reshape(cin_pad, M)

    # Interior mask over flattened padded positions (border == zero padding).
    q = jnp.arange(P, dtype=jnp.int32)
    r, c = q // Wp, q % Wp
    m_img = ((r >= 1) & (r <= H) & (c >= 1) & (c <= W)).astype(jnp.float32)
    mask = jnp.tile(m_img, N).reshape(1, M)

    w1 = _prep_weight(params["w1"], cin_pad)
    w2 = _prep_weight(params["w2"])
    w3 = _prep_weight(params["w3"])
    b1 = params["b1"].reshape(-1, 1)
    b2 = params["b2"].reshape(-1, 1)
    b3 = params["b3"].reshape(-1, 1)

    kernel = functools.partial(_fused_cnn_kernel, H=H, W=W, N=N)
    # Single invocation, no grid: all operands live entirely in VMEM.
    y_flat = pl.pallas_call(
        kernel,
        out_shape=jax.ShapeDtypeStruct((1, M), jnp.float32),
    )(x_flat, mask, w1, b1, w2, b2, w3, b3)

    y = y_flat.reshape(N, Hp, Wp)[:, 1:H + 1, 1:W + 1]
    return y[:, None, :, :]                                     # (N, 1, H, W)


def init_params(key):
    """Deterministic synthetic init matching the module's parameter shapes."""
    ks = jax.random.split(key, 6)

    def w_init(k, shape):
        fan_in = shape[0] * shape[1] * shape[2]
        return jax.random.normal(k, shape, jnp.float32) * (1.0 / jnp.sqrt(fan_in))

    return {
        "w1": w_init(ks[0], (3, 3, 3, 16)),
        "b1": jax.random.normal(ks[1], (16,), jnp.float32) * 0.01,
        "w2": w_init(ks[2], (3, 3, 16, 32)),
        "b2": jax.random.normal(ks[3], (32,), jnp.float32) * 0.01,
        "w3": w_init(ks[4], (3, 3, 32, 1)),
        "b3": jax.random.normal(ks[5], (1,), jnp.float32) * 0.01,
    }


def _reference_forward(x_nchw, params):
    """Pure-JAX reference using lax.conv_general_dilated (NHWC/HWIO)."""
    def conv(x, w, b):
        y = jax.lax.conv_general_dilated(
            x, w, window_strides=(1, 1), padding="SAME",
            dimension_numbers=("NHWC", "HWIO", "NHWC"))
        return y + b

    x = jnp.transpose(x_nchw, (0, 2, 3, 1))
    h1 = jax.nn.relu(conv(x, params["w1"], params["b1"]))
    h2 = jax.nn.relu(conv(h1, params["w2"], params["b2"]))
    y = jax.nn.sigmoid(conv(h2, params["w3"], params["b3"]))
    return jnp.transpose(y, (0, 3, 1, 2))


if __name__ == "__main__":
    key = jax.random.PRNGKey(0)
    k_x, k_p = jax.random.split(key)
    # Shapes consistent with the module: batch=2, in-channels=3, 16x16 images.
    x = jax.random.normal(k_x, (2, 3, 16, 16), jnp.float32)
    params = init_params(k_p)

    out = jax.block_until_ready(simpler_cnn_forward(x, params))
    assert out.shape == (2, 1, 16, 16), out.shape

    ref = jax.block_until_ready(_reference_forward(x, params))
    assert jnp.allclose(out, ref, atol=1e-4, rtol=1e-4), (
        float(jnp.max(jnp.abs(out - ref))))

    print("KERNEL_OK")
</pallas_src>

<mosaic_0001>
module attributes {stable_mosaic.version = 11 : i64} {
  func.func @_fused_cnn_kernel(%arg0: memref<8x648xf32, #tpu.memory_space<vmem>>, %arg1: memref<1x648xf32, #tpu.memory_space<vmem>>, %arg2: memref<16x72xf32, #tpu.memory_space<vmem>>, %arg3: memref<16x1xf32, #tpu.memory_space<vmem>>, %arg4: memref<32x144xf32, #tpu.memory_space<vmem>>, %arg5: memref<32x1xf32, #tpu.memory_space<vmem>>, %arg6: memref<1x288xf32, #tpu.memory_space<vmem>>, %arg7: memref<1x1xf32, #tpu.memory_space<vmem>>, %arg8: memref<1x648xf32, #tpu.memory_space<vmem>>) attributes {dimension_semantics = [], scalar_prefetch = 0 : i64, scratch_operands = 0 : i64, tpu.core_type = #tpu.core_type<tc>} {
    %c0 = arith.constant 0 : index
    %c0_0 = arith.constant 0 : index
    %0 = vector.load %arg1[%c0, %c0_0] : memref<1x648xf32, #tpu.memory_space<vmem>>, vector<1x648xf32>
    %c0_1 = arith.constant 0 : index
    %c0_2 = arith.constant 0 : index
    %1 = vector.load %arg0[%c0_1, %c0_2] : memref<8x648xf32, #tpu.memory_space<vmem>>, vector<8x648xf32>
    %c0_3 = arith.constant 0 : index
    %c0_4 = arith.constant 0 : index
    %2 = vector.load %arg2[%c0_3, %c0_4] : memref<16x72xf32, #tpu.memory_space<vmem>>, vector<16x72xf32>
    %c0_5 = arith.constant 0 : index
    %c0_6 = arith.constant 0 : index
    %3 = vector.load %arg3[%c0_5, %c0_6] : memref<16x1xf32, #tpu.memory_space<vmem>>, vector<16x1xf32>
    %4 = vector.extract_strided_slice %1 {offsets = [0, 629], sizes = [8, 19], strides = [1, 1]} : vector<8x648xf32> to vector<8x19xf32>
    %5 = vector.extract_strided_slice %1 {offsets = [0, 0], sizes = [8, 629], strides = [1, 1]} : vector<8x648xf32> to vector<8x629xf32>
    %6 = tpu.concatenate %4, %5 in 1 : vector<8x19xf32>, vector<8x629xf32> -> vector<8x648xf32>
    %7 = vector.extract_strided_slice %1 {offsets = [0, 630], sizes = [8, 18], strides = [1, 1]} : vector<8x648xf32> to vector<8x18xf32>
    %8 = vector.extract_strided_slice %1 {offsets = [0, 0], sizes = [8, 630], strides = [1, 1]} : vector<8x648xf32> to vector<8x630xf32>
    %9 = tpu.concatenate %7, %8 in 1 : vector<8x18xf32>, vector<8x630xf32> -> vector<8x648xf32>
    %10 = vector.extract_strided_slice %1 {offsets = [0, 631], sizes = [8, 17], strides = [1, 1]} : vector<8x648xf32> to vector<8x17xf32>
    %11 = vector.extract_strided_slice %1 {offsets = [0, 0], sizes = [8, 631], strides = [1, 1]} : vector<8x648xf32> to vector<8x631xf32>
    %12 = tpu.concatenate %10, %11 in 1 : vector<8x17xf32>, vector<8x631xf32> -> vector<8x648xf32>
    %13 = vector.extract_strided_slice %1 {offsets = [0, 647], sizes = [8, 1], strides = [1, 1]} : vector<8x648xf32> to vector<8x1xf32>
    %14 = vector.extract_strided_slice %1 {offsets = [0, 0], sizes = [8, 647], strides = [1, 1]} : vector<8x648xf32> to vector<8x647xf32>
    %15 = tpu.concatenate %13, %14 in 1 : vector<8x1xf32>, vector<8x647xf32> -> vector<8x648xf32>
    %16 = vector.extract_strided_slice %1 {offsets = [0, 1], sizes = [8, 647], strides = [1, 1]} : vector<8x648xf32> to vector<8x647xf32>
    %17 = vector.extract_strided_slice %1 {offsets = [0, 0], sizes = [8, 1], strides = [1, 1]} : vector<8x648xf32> to vector<8x1xf32>
    %18 = tpu.concatenate %16, %17 in 1 : vector<8x647xf32>, vector<8x1xf32> -> vector<8x648xf32>
    %19 = vector.extract_strided_slice %1 {offsets = [0, 17], sizes = [8, 631], strides = [1, 1]} : vector<8x648xf32> to vector<8x631xf32>
    %20 = vector.extract_strided_slice %1 {offsets = [0, 0], sizes = [8, 17], strides = [1, 1]} : vector<8x648xf32> to vector<8x17xf32>
    %21 = tpu.concatenate %19, %20 in 1 : vector<8x631xf32>, vector<8x17xf32> -> vector<8x648xf32>
    %22 = vector.extract_strided_slice %1 {offsets = [0, 18], sizes = [8, 630], strides = [1, 1]} : vector<8x648xf32> to vector<8x630xf32>
    %23 = vector.extract_strided_slice %1 {offsets = [0, 0], sizes = [8, 18], strides = [1, 1]} : vector<8x648xf32> to vector<8x18xf32>
    %24 = tpu.concatenate %22, %23 in 1 : vector<8x630xf32>, vector<8x18xf32> -> vector<8x648xf32>
    %25 = vector.extract_strided_slice %1 {offsets = [0, 19], sizes = [8, 629], strides = [1, 1]} : vector<8x648xf32> to vector<8x629xf32>
    %26 = vector.extract_strided_slice %1 {offsets = [0, 0], sizes = [8, 19], strides = [1, 1]} : vector<8x648xf32> to vector<8x19xf32>
    %27 = tpu.concatenate %25, %26 in 1 : vector<8x629xf32>, vector<8x19xf32> -> vector<8x648xf32>
    %28 = tpu.concatenate %6, %9, %12, %15, %1, %18, %21, %24, %27 in 0 : vector<8x648xf32>, vector<8x648xf32>, vector<8x648xf32>, vector<8x648xf32>, vector<8x648xf32>, vector<8x648xf32>, vector<8x648xf32>, vector<8x648xf32>, vector<8x648xf32> -> vector<72x648xf32>
    %cst = arith.constant dense<0.000000e+00> : vector<16x648xf32>
    %29 = tpu.matmul %2, %28, %cst {dimension_numbers = #tpu.dot_dimension_numbers<[1], [0], [0], [1], [0, 0, 1, 1], [], []>} : vector<16x72xf32>, vector<72x648xf32>, vector<16x648xf32> -> vector<16x648xf32>
    %30 = vector.broadcast %3 : vector<16x1xf32> to vector<16x648xf32>
    %31 = arith.addf %29, %30 : vector<16x648xf32>
    %cst_7 = arith.constant 0.000000e+00 : f32
    %32 = vector.broadcast %cst_7 : f32 to vector<16x648xf32>
    %33 = arith.maximumf %31, %32 : vector<16x648xf32>
    %34 = vector.broadcast %0 : vector<1x648xf32> to vector<16x648xf32>
    %35 = arith.mulf %33, %34 : vector<16x648xf32>
    %c0_8 = arith.constant 0 : index
    %c0_9 = arith.constant 0 : index
    %36 = vector.load %arg4[%c0_8, %c0_9] : memref<32x144xf32, #tpu.memory_space<vmem>>, vector<32x144xf32>
    %c0_10 = arith.constant 0 : index
    %c0_11 = arith.constant 0 : index
    %37 = vector.load %arg5[%c0_10, %c0_11] : memref<32x1xf32, #tpu.memory_space<vmem>>, vector<32x1xf32>
    %38 = vector.extract_strided_slice %35 {offsets = [0, 629], sizes = [16, 19], strides = [1, 1]} : vector<16x648xf32> to vector<16x19xf32>
    %39 = vector.extract_strided_slice %35 {offsets = [0, 0], sizes = [16, 629], strides = [1, 1]} : vector<16x648xf32> to vector<16x629xf32>
    %40 = tpu.concatenate %38, %39 in 1 : vector<16x19xf32>, vector<16x629xf32> -> vector<16x648xf32>
    %41 = vector.extract_strided_slice %35 {offsets = [0, 630], sizes = [16, 18], strides = [1, 1]} : vector<16x648xf32> to vector<16x18xf32>
    %42 = vector.extract_strided_slice %35 {offsets = [0, 0], sizes = [16, 630], strides = [1, 1]} : vector<16x648xf32> to vector<16x630xf32>
    %43 = tpu.concatenate %41, %42 in 1 : vector<16x18xf32>, vector<16x630xf32> -> vector<16x648xf32>
    %44 = vector.extract_strided_slice %35 {offsets = [0, 631], sizes = [16, 17], strides = [1, 1]} : vector<16x648xf32> to vector<16x17xf32>
    %45 = vector.extract_strided_slice %35 {offsets = [0, 0], sizes = [16, 631], strides = [1, 1]} : vector<16x648xf32> to vector<16x631xf32>
    %46 = tpu.concatenate %44, %45 in 1 : vector<16x17xf32>, vector<16x631xf32> -> vector<16x648xf32>
    %47 = vector.extract_strided_slice %35 {offsets = [0, 647], sizes = [16, 1], strides = [1, 1]} : vector<16x648xf32> to vector<16x1xf32>
    %48 = vector.extract_strided_slice %35 {offsets = [0, 0], sizes = [16, 647], strides = [1, 1]} : vector<16x648xf32> to vector<16x647xf32>
    %49 = tpu.concatenate %47, %48 in 1 : vector<16x1xf32>, vector<16x647xf32> -> vector<16x648xf32>
    %50 = vector.extract_strided_slice %35 {offsets = [0, 1], sizes = [16, 647], strides = [1, 1]} : vector<16x648xf32> to vector<16x647xf32>
    %51 = vector.extract_strided_slice %35 {offsets = [0, 0], sizes = [16, 1], strides = [1, 1]} : vector<16x648xf32> to vector<16x1xf32>
    %52 = tpu.concatenate %50, %51 in 1 : vector<16x647xf32>, vector<16x1xf32> -> vector<16x648xf32>
    %53 = vector.extract_strided_slice %35 {offsets = [0, 17], sizes = [16, 631], strides = [1, 1]} : vector<16x648xf32> to vector<16x631xf32>
    %54 = vector.extract_strided_slice %35 {offsets = [0, 0], sizes = [16, 17], strides = [1, 1]} : vector<16x648xf32> to vector<16x17xf32>
    %55 = tpu.concatenate %53, %54 in 1 : vector<16x631xf32>, vector<16x17xf32> -> vector<16x648xf32>
    %56 = vector.extract_strided_slice %35 {offsets = [0, 18], sizes = [16, 630], strides = [1, 1]} : vector<16x648xf32> to vector<16x630xf32>
    %57 = vector.extract_strided_slice %35 {offsets = [0, 0], sizes = [16, 18], strides = [1, 1]} : vector<16x648xf32> to vector<16x18xf32>
    %58 = tpu.concatenate %56, %57 in 1 : vector<16x630xf32>, vector<16x18xf32> -> vector<16x648xf32>
    %59 = vector.extract_strided_slice %35 {offsets = [0, 19], sizes = [16, 629], strides = [1, 1]} : vector<16x648xf32> to vector<16x629xf32>
    %60 = vector.extract_strided_slice %35 {offsets = [0, 0], sizes = [16, 19], strides = [1, 1]} : vector<16x648xf32> to vector<16x19xf32>
    %61 = tpu.concatenate %59, %60 in 1 : vector<16x629xf32>, vector<16x19xf32> -> vector<16x648xf32>
    %62 = tpu.concatenate %40, %43, %46, %49, %35, %52, %55, %58, %61 in 0 : vector<16x648xf32>, vector<16x648xf32>, vector<16x648xf32>, vector<16x648xf32>, vector<16x648xf32>, vector<16x648xf32>, vector<16x648xf32>, vector<16x648xf32>, vector<16x648xf32> -> vector<144x648xf32>
    %cst_12 = arith.constant dense<0.000000e+00> : vector<32x648xf32>
    %63 = tpu.matmul %36, %62, %cst_12 {dimension_numbers = #tpu.dot_dimension_numbers<[1], [0], [0], [1], [0, 0, 1, 1], [], []>} : vector<32x144xf32>, vector<144x648xf32>, vector<32x648xf32> -> vector<32x648xf32>
    %64 = vector.broadcast %37 : vector<32x1xf32> to vector<32x648xf32>
    %65 = arith.addf %63, %64 : vector<32x648xf32>
    %cst_13 = arith.constant 0.000000e+00 : f32
    %66 = vector.broadcast %cst_13 : f32 to vector<32x648xf32>
    %67 = arith.maximumf %65, %66 : vector<32x648xf32>
    %68 = vector.broadcast %0 : vector<1x648xf32> to vector<32x648xf32>
    %69 = arith.mulf %67, %68 : vector<32x648xf32>
    %c0_14 = arith.constant 0 : index
    %c0_15 = arith.constant 0 : index
    %70 = vector.load %arg6[%c0_14, %c0_15] : memref<1x288xf32, #tpu.memory_space<vmem>>, vector<1x288xf32>
    %c0_16 = arith.constant 0 : index
    %c0_17 = arith.constant 0 : index
    %71 = vector.load %arg7[%c0_16, %c0_17] : memref<1x1xf32, #tpu.memory_space<vmem>>, vector<1x1xf32>
    %72 = vector.extract_strided_slice %69 {offsets = [0, 629], sizes = [32, 19], strides = [1, 1]} : vector<32x648xf32> to vector<32x19xf32>
    %73 = vector.extract_strided_slice %69 {offsets = [0, 0], sizes = [32, 629], strides = [1, 1]} : vector<32x648xf32> to vector<32x629xf32>
    %74 = tpu.concatenate %72, %73 in 1 : vector<32x19xf32>, vector<32x629xf32> -> vector<32x648xf32>
    %75 = vector.extract_strided_slice %69 {offsets = [0, 630], sizes = [32, 18], strides = [1, 1]} : vector<32x648xf32> to vector<32x18xf32>
    %76 = vector.extract_strided_slice %69 {offsets = [0, 0], sizes = [32, 630], strides = [1, 1]} : vector<32x648xf32> to vector<32x630xf32>
    %77 = tpu.concatenate %75, %76 in 1 : vector<32x18xf32>, vector<32x630xf32> -> vector<32x648xf32>
    %78 = vector.extract_strided_slice %69 {offsets = [0, 631], sizes = [32, 17], strides = [1, 1]} : vector<32x648xf32> to vector<32x17xf32>
    %79 = vector.extract_strided_slice %69 {offsets = [0, 0], sizes = [32, 631], strides = [1, 1]} : vector<32x648xf32> to vector<32x631xf32>
    %80 = tpu.concatenate %78, %79 in 1 : vector<32x17xf32>, vector<32x631xf32> -> vector<32x648xf32>
    %81 = vector.extract_strided_slice %69 {offsets = [0, 647], sizes = [32, 1], strides = [1, 1]} : vector<32x648xf32> to vector<32x1xf32>
    %82 = vector.extract_strided_slice %69 {offsets = [0, 0], sizes = [32, 647], strides = [1, 1]} : vector<32x648xf32> to vector<32x647xf32>
    %83 = tpu.concatenate %81, %82 in 1 : vector<32x1xf32>, vector<32x647xf32> -> vector<32x648xf32>
    %84 = vector.extract_strided_slice %69 {offsets = [0, 1], sizes = [32, 647], strides = [1, 1]} : vector<32x648xf32> to vector<32x647xf32>
    %85 = vector.extract_strided_slice %69 {offsets = [0, 0], sizes = [32, 1], strides = [1, 1]} : vector<32x648xf32> to vector<32x1xf32>
    %86 = tpu.concatenate %84, %85 in 1 : vector<32x647xf32>, vector<32x1xf32> -> vector<32x648xf32>
    %87 = vector.extract_strided_slice %69 {offsets = [0, 17], sizes = [32, 631], strides = [1, 1]} : vector<32x648xf32> to vector<32x631xf32>
    %88 = vector.extract_strided_slice %69 {offsets = [0, 0], sizes = [32, 17], strides = [1, 1]} : vector<32x648xf32> to vector<32x17xf32>
    %89 = tpu.concatenate %87, %88 in 1 : vector<32x631xf32>, vector<32x17xf32> -> vector<32x648xf32>
    %90 = vector.extract_strided_slice %69 {offsets = [0, 18], sizes = [32, 630], strides = [1, 1]} : vector<32x648xf32> to vector<32x630xf32>
    %91 = vector.extract_strided_slice %69 {offsets = [0, 0], sizes = [32, 18], strides = [1, 1]} : vector<32x648xf32> to vector<32x18xf32>
    %92 = tpu.concatenate %90, %91 in 1 : vector<32x630xf32>, vector<32x18xf32> -> vector<32x648xf32>
    %93 = vector.extract_strided_slice %69 {offsets = [0, 19], sizes = [32, 629], strides = [1, 1]} : vector<32x648xf32> to vector<32x629xf32>
    %94 = vector.extract_strided_slice %69 {offsets = [0, 0], sizes = [32, 19], strides = [1, 1]} : vector<32x648xf32> to vector<32x19xf32>
    %95 = tpu.concatenate %93, %94 in 1 : vector<32x629xf32>, vector<32x19xf32> -> vector<32x648xf32>
    %96 = tpu.concatenate %74, %77, %80, %83, %69, %86, %89, %92, %95 in 0 : vector<32x648xf32>, vector<32x648xf32>, vector<32x648xf32>, vector<32x648xf32>, vector<32x648xf32>, vector<32x648xf32>, vector<32x648xf32>, vector<32x648xf32>, vector<32x648xf32> -> vector<288x648xf32>
    %cst_18 = arith.constant dense<0.000000e+00> : vector<1x648xf32>
    %97 = tpu.matmul %70, %96, %cst_18 {dimension_numbers = #tpu.dot_dimension_numbers<[1], [0], [0], [1], [0, 0, 1, 1], [], []>} : vector<1x288xf32>, vector<288x648xf32>, vector<1x648xf32> -> vector<1x648xf32>
    %98 = vector.broadcast %71 : vector<1x1xf32> to vector<1x648xf32>
    %99 = arith.addf %97, %98 : vector<1x648xf32>
    %100 = arith.negf %99 : vector<1x648xf32>
    %101 = math.exp %100 : vector<1x648xf32>
    %cst_19 = arith.constant 1.000000e+00 : f32
    %102 = vector.broadcast %cst_19 : f32 to vector<1x648xf32>
    %103 = arith.addf %102, %101 : vector<1x648xf32>
    %104 = arith.divf %102, %103 : vector<1x648xf32>
    %c0_20 = arith.constant 0 : index
    %c0_21 = arith.constant 0 : index
    %105 = vector.load %arg8[%c0_20, %c0_21] : memref<1x648xf32, #tpu.memory_space<vmem>>, vector<1x648xf32>
    tpu.vector_store %arg8[%c0_20, %c0_21], %104 {strides = array<i32>} : memref<1x648xf32, #tpu.memory_space<vmem>>, vector<1x648xf32>,
    return
  }
}

</mosaic_0001>

<llo_original>
// kernel: tile.8
$region0: #{tile.8}
  #allocation0 [shape = 's32[1]{0}', space=sflag, size = 0x4, scoped, tag = 'scoped memory for tile.8']
  %s0 = inlined_call_operand.vmem [shape: f32[324], index: 0, kind: input, shape index: {}]
  %s1 = inlined_call_operand.vmem [shape: f32[2,324], index: 1, kind: output, shape index: {}]
  // Predicated region
  $region2: #{tile.8} parent=0 // pred_check
    _
  $region3: #{tile.8} parent=0 // pred_check_branch
    %3 = sbr.rel (0) target = $region5
  $region4: #{tile.8} parent=0 // pred_region
    _
  $region5: #{tile.8} parent=0 // pred_fallthru
    _
  %v4 = vld [vmem:[%s0] ss:$0 sm:$0xff]
  %5 = vst [vmem:[%s1] sm:$0x3] %v4
  %s6 = scalar_lea.vmem %s0, 1
  %v7 = vld [vmem:[%s6] ss:$0 sm:$0xff]
  %s8 = scalar_lea.vmem %s1, 2
  %9 = vst [vmem:[%s8] sm:$0x3] %v7
  %s10 = scalar_lea.vmem %s0, 2
  %v11 = vld [vmem:[%s10] ss:$0 sm:$0xff]
  %s12 = scalar_lea.vmem %s1, 4
  %13 = vst [vmem:[%s12] sm:$0x3] %v11

// kernel: tile.9
$region0: #{tile.9}
  %s0 = inlined_call_operand.vmem [shape: f32[2,324], index: 0, kind: input, shape index: {}]
  %s1 = inlined_call_operand.vmem [shape: f32[1,648], index: 1, kind: output, shape index: {}]
  $region1: #{tile.9} parent=0
    #allocation0 [shape = 'u8[24576]{0}', space=vmem, size = 0x6000, scoped, tag = 'scoped mem for output reshape']
    #allocation1 [shape = 'u8[12288]{0}', space=vmem, size = 0x3000, scoped, tag = 'scoped mem for input reshape']
    %s3 = sshll.u32 1, 2
    %s4 = ssub.s32 %s3, 1
    %s5 = smul.addr 2, 2
    %s6 = scalar_lea.vmem %s0, %s5
    %v7 = vld [vmem:[%s6] sm:%s4]
    %s8 = scalar_lea.vmem [#allocation1], 16
    %9 = vst [vmem:[%s8] sm:%s4] %v7
    %s10 = scalar_lea.vmem %s0, 2
    %v11 = vld [vmem:[%s10] sm:%s4]
    %s12 = scalar_lea.vmem [#allocation1], 8
    %13 = vst [vmem:[%s12] sm:%s4] %v11
    %v14 = vld [vmem:[%s0] sm:%s4]
    %15 = vst [vmem:[#allocation1] sm:%s4] %v14
    %s16 = scalar_lea.vmem [#allocation1], 16
    %v17 = vld [vmem:[%s16] sm:$0x1]
    %vm18 = vcmask 556032
    %s19 = scalar_lea.vmem [#allocation0], 16
    %20 = vst.msk [vmem:[%s19] sm:$0x1] %vm18, %v17
    %s21 = smov 3
    %v22 = vld [vmem:[#allocation1] ss:$8 sm:%s21]
    %23 = vst [vmem:[#allocation0] ss:$8 sm:$0x3] %v22
    %s24 = scalar_lea.vmem [#allocation1], 17
    %v25 = vld [vmem:[%s24] sm:$0x1]
    %s26 = scalar_lea.vmem [#allocation1], 17
    %s27 = smov 3
    %v28 = vld [vmem:[%s26] ss:$-16 sm:%s27]
    %s29 = scalar_lea.vmem [#allocation1], 7
    %v30 = vld [vmem:[%s29] sm:$0x4]
    %vm31 = vcmask 1042434
    %v32 = vsel %vm31, %v30, %v28
    %vm33 = vcmask 490496
    %v34 = vsel %vm33, %v32, %v25
    %35 = vrot.lane.b32.xlu0 %v34, 68
    %v36 = vpop.permute.xlu0 %35
    %vm37 = vcmask 64512
    %s38 = scalar_lea.vmem [#allocation0], 40
    %39 = vst.msk [vmem:[%s38] sm:$0x1] %vm37, %v36
    %vm40 = vcmask 1048096
    %s41 = scalar_lea.vmem [#allocation0], 32
    %42 = vst.msk [vmem:[%s41] ss:$-16 sm:$0x3] %vm40, %v36
    %s43 = scalar_lea.vmem [#allocation0], 22
    %44 = vst.msk [vmem:[%s43] sm:$0x4] %vm40, %v36
    %s45 = scalar_lea.vmem [#allocation1], 9
    %s46 = smov 3
    %v47 = vld [vmem:[%s45] ss:$-8 sm:%s46]
    %48 = vrot.lane.b32.xlu0 %v47, 68
    %v49 = vpop.permute.xlu0 %48
    %vm50 = vcmask 556032
    %s51 = scalar_lea.vmem [#allocation0], 32
    %52 = vst.msk [vmem:[%s51] ss:$-8 sm:$0x3] %vm50, %v49
    %s54 = sshll.u32 1, 1
    %s55 = ssub.s32 %s54, 1
    %v57 = vld [vmem:[#allocation0] sm:%s55]
    %s58 = sshll.u32 1, 1
    %s59 = ssub.s32 %s58, 1
    %60 = vst [vmem:[%s1] sm:%s59] %v57
    %s61 = scalar_lea.vmem [#allocation0], 8
    %v62 = vld [vmem:[%s61] sm:%s55]
    %s63 = sshll.u32 1, 1
    %s64 = ssub.s32 %s63, 1
    %s65 = scalar_lea.vmem %s1, 1
    %66 = vst [vmem:[%s65] sm:%s64] %v62
    %s67 = scalar_lea.vmem [#allocation0], 16
    %v68 = vld [vmem:[%s67] sm:%s55]
    %s69 = sshll.u32 1, 1
    %s70 = ssub.s32 %s69, 1
    %s71 = smul.addr 1, 2
    %s72 = scalar_lea.vmem %s1, %s71
    %73 = vst [vmem:[%s72] sm:%s70] %v68
    %s74 = scalar_lea.vmem [#allocation0], 24
    %v75 = vld [vmem:[%s74] sm:%s55]
    %s76 = sshll.u32 1, 1
    %s77 = ssub.s32 %s76, 1
    %s78 = smul.addr 1, 3
    %s79 = scalar_lea.vmem %s1, %s78
    %80 = vst [vmem:[%s79] sm:%s77] %v75
    %s81 = scalar_lea.vmem [#allocation0], 32
    %v82 = vld [vmem:[%s81] sm:%s55]
    %s83 = sshll.u32 1, 1
    %s84 = ssub.s32 %s83, 1
    %s85 = smul.addr 1, 4
    %s86 = scalar_lea.vmem %s1, %s85
    %87 = vst [vmem:[%s86] sm:%s84] %v82
    %s88 = scalar_lea.vmem [#allocation0], 40
    %v89 = vld [vmem:[%s88] sm:%s55]
    %s90 = sshll.u32 1, 1
    %s91 = ssub.s32 %s90, 1
    %s92 = smul.addr 1, 5
    %s93 = scalar_lea.vmem %s1, %s92
    %94 = vst [vmem:[%s93] sm:%s91] %v89

// kernel: simpler_cnn_forward.1
$region0: #{simpler_cnn_forward.1}
  #allocation0 [shape = 'u32[]', space=smem, size = 0x4, offset = 0x4, fixed_abs, tag = 'smem constant byte address 0x4 - core index']
  #allocation1 [shape = 'u32[144,128]{1,0:T(1,128)}', space=vmem, size = 0x12000, scoped, tag = 'internal scratch']
  #allocation2 [shape = 'f32[1,1]{1,0:T(1,128)S(1)}', space=vmem, size = 0x200, scoped, tag = 'scoped memory for simpler_cnn_forward.1']
  %s0 = inlined_call_operand.vmem [shape: f32[8,648], index: 0, kind: input, shape index: {}]
  %s1 = inlined_call_operand.vmem [shape: f32[1,648], index: 1, kind: input, shape index: {}]
  %s2 = inlined_call_operand.vmem [shape: f32[16,72], index: 2, kind: input, shape index: {}]
  %s3 = inlined_call_operand.vmem [shape: f32[16,1], index: 3, kind: input, shape index: {}]
  %s4 = inlined_call_operand.vmem [shape: f32[32,144], index: 4, kind: input, shape index: {}]
  %s5 = inlined_call_operand.vmem [shape: f32[32,1], index: 5, kind: input, shape index: {}]
  %s6 = inlined_call_operand.vmem [shape: f32[1,288], index: 6, kind: input, shape index: {}]
  %s7 = inlined_call_operand.<no memory space> [shape: f32[1,1], index: 7, kind: input, shape index: {}]
  %s8 = inlined_call_operand.vmem [shape: f32[1,648], index: 8, kind: output, shape index: {}]
  %s9 = sld [smem:[#allocation0]]
  $region42: #{simpler_cnn_forward.1} parent=0
    _
  %s11 = ssub.s32 1, %s9
  %s12 = scalar_select 0, %s11, %s9
  %v13 = vstv %s7
  %14 = vst [vmem:[#allocation2] sm:$0x1] %v13
  // Predicated region
  $region2: #{simpler_cnn_forward.1} parent=0 // pred_check
    _
  $region3: #{simpler_cnn_forward.1} parent=0 // pred_check_branch
    %16 = sbr.rel (0) target = $region5
  $region4: #{simpler_cnn_forward.1} parent=0 // pred_region
    _
  $region5: #{simpler_cnn_forward.1} parent=0 // pred_fallthru
    _
  // Predicated region
  $region6: #{simpler_cnn_forward.1} parent=0 // pred_check
    _
  $region7: #{simpler_cnn_forward.1} parent=0 // pred_check_branch
    %18 = sbr.rel (0) target = $region9
  $region8: #{simpler_cnn_forward.1} parent=0 // pred_region
    _
  $region9: #{simpler_cnn_forward.1} parent=0 // pred_fallthru
    _
  // Predicated region
  $region10: #{simpler_cnn_forward.1} parent=0 // pred_check
    _
  $region11: #{simpler_cnn_forward.1} parent=0 // pred_check_branch
    %20 = sbr.rel (0) target = $region13
  $region12: #{simpler_cnn_forward.1} parent=0 // pred_region
    _
  $region13: #{simpler_cnn_forward.1} parent=0 // pred_fallthru
    _
  // Predicated region
  $region14: #{simpler_cnn_forward.1} parent=0 // pred_check
    _
  $region15: #{simpler_cnn_forward.1} parent=0 // pred_check_branch
    %22 = sbr.rel (0) target = $region17
  $region16: #{simpler_cnn_forward.1} parent=0 // pred_region
    _
  $region17: #{simpler_cnn_forward.1} parent=0 // pred_fallthru
    _
  // Predicated region
  $region18: #{simpler_cnn_forward.1} parent=0 // pred_check
    _
  $region19: #{simpler_cnn_forward.1} parent=0 // pred_check_branch
    %24 = sbr.rel (0) target = $region21
  $region20: #{simpler_cnn_forward.1} parent=0 // pred_region
    _
  $region21: #{simpler_cnn_forward.1} parent=0 // pred_fallthru
    _
  // Predicated region
  $region22: #{simpler_cnn_forward.1} parent=0 // pred_check
    _
  $region23: #{simpler_cnn_forward.1} parent=0 // pred_check_branch
    %26 = sbr.rel (0) target = $region25
  $region24: #{simpler_cnn_forward.1} parent=0 // pred_region
    _
  $region25: #{simpler_cnn_forward.1} parent=0 // pred_fallthru
    _
  // Predicated region
  $region26: #{simpler_cnn_forward.1} parent=0 // pred_check
    _
  $region27: #{simpler_cnn_forward.1} parent=0 // pred_check_branch
    %28 = sbr.rel (0) target = $region29
  $region28: #{simpler_cnn_forward.1} parent=0 // pred_region
    _
  $region29: #{simpler_cnn_forward.1} parent=0 // pred_fallthru
    _
  // Predicated region
  $region30: #{simpler_cnn_forward.1} parent=0 // pred_check
    _
  $region31: #{simpler_cnn_forward.1} parent=0 // pred_check_branch
    %30 = sbr.rel (0) target = $region33
  $region32: #{simpler_cnn_forward.1} parent=0 // pred_region
    _
  $region33: #{simpler_cnn_forward.1} parent=0 // pred_fallthru
    _
  %v31 = vld [vmem:[%s1] sm:$0x3f]
  %v32 = vld [vmem:[%s0] sm:$0xff]
  %v33 = vld [vmem:[%s0 + $0x8] sm:$0xff]
  %v34 = vld [vmem:[%s0 + $0x10] sm:$0xff]
  %v35 = vld [vmem:[%s0 + $0x18] sm:$0xff]
  %v36 = vld [vmem:[%s0 + $0x20] sm:$0xff]
  %v37 = vld [vmem:[%s0 + $0x28] sm:$0xff]
  %v38 = vld [vmem:[%s2] sm:$0xff]
  %v39 = vld [vmem:[%s2 + $0x8] sm:$0xff]
  %v40 = vld [vmem:[%s3] sm:$0xff]
  %v41 = vld [vmem:[%s3 + $0x8] sm:$0xff]
  %44 = vrot.lane.b32.xlu0 %v36, 11
  %v45 = vpop.permute.xlu0 %44
  %46 = vrot.lane.b32.xlu0 %v37, 11
  %v47 = vpop.permute.xlu0 %46
  %vm48 = vcmask 89088
  %v49 = vsel %vm48, %v45, %v47
  %55 = vrot.lane.b32.xlu0 %v32, 19
  %v56 = vpop.permute.xlu0 %55
  %57 = vrot.lane.b32.xlu0 %v33, 19
  %v58 = vpop.permute.xlu0 %57
  %59 = vrot.lane.b32.xlu0 %v34, 19
  %v60 = vpop.permute.xlu0 %59
  %61 = vrot.lane.b32.xlu0 %v35, 19
  %v62 = vpop.permute.xlu0 %61
  %63 = vrot.lane.b32.xlu0 %v36, 19
  %v64 = vpop.permute.xlu0 %63
  %vm65 = vcmask 154624
  %v66 = vsel %vm65, %v56, %v58
  %v67 = vsel %vm65, %v58, %v60
  %v68 = vsel %vm65, %v60, %v62
  %v69 = vsel %vm65, %v62, %v64
  %v76 = vsel %vm65, %v49, %v56
  %77 = vrot.lane.b32.xlu0 %v36, 10
  %v78 = vpop.permute.xlu0 %77
  %79 = vrot.lane.b32.xlu0 %v37, 10
  %v80 = vpop.permute.xlu0 %79
  %vm81 = vcmask 80896
  %v82 = vsel %vm81, %v78, %v80
  %84 = vrot.lane.b32.xlu0 %v32, 18
  %v85 = vpop.permute.xlu0 %84
  %86 = vrot.lane.b32.xlu0 %v33, 18
  %v87 = vpop.permute.xlu0 %86
  %88 = vrot.lane.b32.xlu0 %v34, 18
  %v89 = vpop.permute.xlu0 %88
  %90 = vrot.lane.b32.xlu0 %v35, 18
  %v91 = vpop.permute.xlu0 %90
  %92 = vrot.lane.b32.xlu0 %v36, 18
  %v93 = vpop.permute.xlu0 %92
  %vm94 = vcmask 146432
  %v95 = vsel %vm94, %v85, %v87
  %v96 = vsel %vm94, %v87, %v89
  %v97 = vsel %vm94, %v89, %v91
  %v98 = vsel %vm94, %v91, %v93
  %v105 = vsel %vm94, %v82, %v85
  %106 = vrot.lane.b32.xlu0 %v36, 9
  %v107 = vpop.permute.xlu0 %106
  %108 = vrot.lane.b32.xlu0 %v37, 9
  %v109 = vpop.permute.xlu0 %108
  %vm110 = vcmask 72704
  %v111 = vsel %vm110, %v107, %v109
  %113 = vrot.lane.b32.xlu0 %v32, 17
  %v114 = vpop.permute.xlu0 %113
  %115 = vrot.lane.b32.xlu0 %v33, 17
  %v116 = vpop.permute.xlu0 %115
  %117 = vrot.lane.b32.xlu0 %v34, 17
  %v118 = vpop.permute.xlu0 %117
  %119 = vrot.lane.b32.xlu0 %v35, 17
  %v120 = vpop.permute.xlu0 %119
  %121 = vrot.lane.b32.xlu0 %v36, 17
  %v122 = vpop.permute.xlu0 %121
  %vm123 = vcmask 138240
  %v124 = vsel %vm123, %v114, %v116
  %v125 = vsel %vm123, %v116, %v118
  %v126 = vsel %vm123, %v118, %v120
  %v127 = vsel %vm123, %v120, %v122
  %v134 = vsel %vm123, %v111, %v114
  %135 = vrot.lane.b32.xlu0 %v37, 121
  %v136 = vpop.permute.xlu0 %135
  %138 = vrot.lane.b32.xlu0 %v32, 1
  %v139 = vpop.permute.xlu0 %138
  %140 = vrot.lane.b32.xlu0 %v33, 1
  %v141 = vpop.permute.xlu0 %140
  %142 = vrot.lane.b32.xlu0 %v34, 1
  %v143 = vpop.permute.xlu0 %142
  %144 = vrot.lane.b32.xlu0 %v35, 1
  %v145 = vpop.permute.xlu0 %144
  %146 = vrot.lane.b32.xlu0 %v36, 1
  %v147 = vpop.permute.xlu0 %146
  %148 = vrot.lane.b32.xlu0 %v37, 1
  %v149 = vpop.permute.xlu0 %148
  %vm150 = vcmask 7168
  %v151 = vsel %vm150, %v139, %v141
  %v152 = vsel %vm150, %v141, %v143
  %v153 = vsel %vm150, %v143, %v145
  %v154 = vsel %vm150, %v145, %v147
  %v155 = vsel %vm150, %v147, %v149
  %v162 = vsel %vm150, %v136, %v139
  %163 = vrot.lane.b32.xlu0 %v32, 127
  %v164 = vpop.permute.xlu0 %163
  %165 = vrot.lane.b32.xlu0 %v33, 127
  %v166 = vpop.permute.xlu0 %165
  %167 = vrot.lane.b32.xlu0 %v34, 127
  %v168 = vpop.permute.xlu0 %167
  %169 = vrot.lane.b32.xlu0 %v35, 127
  %v170 = vpop.permute.xlu0 %169
  %171 = vrot.lane.b32.xlu0 %v36, 127
  %v172 = vpop.permute.xlu0 %171
  %173 = vrot.lane.b32.xlu0 %v37, 127
  %v174 = vpop.permute.xlu0 %173
  %vm175 = vcmask 1039360
  %v176 = vsel %vm175, %v164, %v166
  %v177 = vsel %vm175, %v166, %v168
  %v178 = vsel %vm175, %v168, %v170
  %v179 = vsel %vm175, %v170, %v172
  %v180 = vsel %vm175, %v172, %v174
  %187 = vrot.lane.b32.xlu0 %v32, 7
  %v188 = vpop.permute.xlu0 %187
  %vm190 = vcmask 56320
  %v191 = vsel %vm190, %v174, %v188
  %192 = vrot.lane.b32.xlu0 %v32, 111
  %v193 = vpop.permute.xlu0 %192
  %194 = vrot.lane.b32.xlu0 %v33, 111
  %v195 = vpop.permute.xlu0 %194
  %196 = vrot.lane.b32.xlu0 %v34, 111
  %v197 = vpop.permute.xlu0 %196
  %198 = vrot.lane.b32.xlu0 %v35, 111
  %v199 = vpop.permute.xlu0 %198
  %200 = vrot.lane.b32.xlu0 %v36, 111
  %v201 = vpop.permute.xlu0 %200
  %202 = vrot.lane.b32.xlu0 %v37, 111
  %v203 = vpop.permute.xlu0 %202
  %vm204 = vcmask 908288
  %v205 = vsel %vm204, %v193, %v195
  %v206 = vsel %vm204, %v195, %v197
  %v207 = vsel %vm204, %v197, %v199
  %v208 = vsel %vm204, %v199, %v201
  %v209 = vsel %vm204, %v201, %v203
  %215 = vrot.lane.b32.xlu0 %v32, 119
  %v216 = vpop.permute.xlu0 %215
  %vm218 = vcmask 973824
  %v219 = vsel %vm218, %v209, %v216
  %220 = vrot.lane.b32.xlu0 %v32, 110
  %v221 = vpop.permute.xlu0 %220
  %222 = vrot.lane.b32.xlu0 %v33, 110
  %v223 = vpop.permute.xlu0 %222
  %224 = vrot.lane.b32.xlu0 %v34, 110
  %v225 = vpop.permute.xlu0 %224
  %226 = vrot.lane.b32.xlu0 %v35, 110
  %v227 = vpop.permute.xlu0 %226
  %228 = vrot.lane.b32.xlu0 %v36, 110
  %v229 = vpop.permute.xlu0 %228
  %230 = vrot.lane.b32.xlu0 %v37, 110
  %v231 = vpop.permute.xlu0 %230
  %vm232 = vcmask 900096
  %v233 = vsel %vm232, %v221, %v223
  %v234 = vsel %vm232, %v223, %v225
  %v235 = vsel %vm232, %v225, %v227
  %v236 = vsel %vm232, %v227, %v229
  %v237 = vsel %vm232, %v229, %v231
  %243 = vrot.lane.b32.xlu0 %v32, 118
  %v244 = vpop.permute.xlu0 %243
  %vm246 = vcmask 965632
  %v247 = vsel %vm246, %v237, %v244
  %248 = vrot.lane.b32.xlu0 %v32, 109
  %v249 = vpop.permute.xlu0 %248
  %250 = vrot.lane.b32.xlu0 %v33, 109
  %v251 = vpop.permute.xlu0 %250
  %252 = vrot.lane.b32.xlu0 %v34, 109
  %v253 = vpop.permute.xlu0 %252
  %254 = vrot.lane.b32.xlu0 %v35, 109
  %v255 = vpop.permute.xlu0 %254
  %256 = vrot.lane.b32.xlu0 %v36, 109
  %v257 = vpop.permute.xlu0 %256
  %258 = vrot.lane.b32.xlu0 %v37, 109
  %v259 = vpop.permute.xlu0 %258
  %vm260 = vcmask 891904
  %v261 = vsel %vm260, %v249, %v251
  %v262 = vsel %vm260, %v251, %v253
  %v263 = vsel %vm260, %v253, %v255
  %v264 = vsel %vm260, %v255, %v257
  %v265 = vsel %vm260, %v257, %v259
  %271 = vrot.lane.b32.xlu0 %v32, 117
  %v272 = vpop.permute.xlu0 %271
  %vm274 = vcmask 957440
  %v275 = vsel %vm274, %v265, %v272
  %277 = vset.pattern.permute.xlu0 0
  %278 = vperm.xlu0 %277, %v40
  %v279 = vpop.permute.xlu0 %278
  %282 = vset.pattern.permute.xlu0 0
  %283 = vperm.xlu0 %282, %v41
  %v284 = vpop.permute.xlu0 %283
  %vm286 = vcmask 588800
  %v288 = vsel %vm286, %v38, 0
  %v291 = vsel %vm286, %v39, 0
  %293 = vmatprep.subr.mxu0 0.0
  %294 = vmatpush1.msra.mxu0 0.0
  %295 = vmatprep.subr.mxu0 0.0
  %296 = vmatpush1.msra.mxu0 0.0
  %297 = vmatprep.subr.mxu0 0.0
  %298 = vmatpush1.msra.mxu0 0.0
  %299 = vmatprep.subr.mxu0 0.0
  %300 = vmatpush1.msra.mxu0 0.0
  %301 = vmatprep.subr.mxu0 0.0
  %302 = vmatpush1.msra.mxu0 0.0
  %303 = vmatprep.subr.mxu0 0.0
  %304 = vmatpush1.msra.mxu0 0.0
  %305 = vmatprep.subr.mxu0 0.0
  %306 = vmatpush1.msra.mxu0 0.0
  %307 = vmatprep.subr.mxu0 %v262
  %308 = vmatpush1.msra.mxu0 %v261
  %309 = vmatprep.subr.mxu0 %v234
  %310 = vmatpush1.msra.mxu0 %v233
  %311 = vmatprep.subr.mxu0 %v206
  %312 = vmatpush1.msra.mxu0 %v205
  %313 = vmatprep.subr.mxu0 %v177
  %314 = vmatpush1.msra.mxu0 %v176
  %315 = vmatprep.subr.mxu0 %v33
  %316 = vmatpush1.msra.mxu0 %v32
  %317 = vmatprep.subr.mxu0 %v151
  %318 = vmatpush1.msra.mxu0 %v162
  %319 = vmatprep.subr.mxu0 %v124
  %320 = vmatpush1.msra.mxu0 %v134
  %321 = vmatprep.subr.mxu0 %v95
  %322 = vmatpush1.msra.mxu0 %v105
  %323 = vmatprep.subr.mxu0 %v66
  %324 = vmatpush1.msra.mxu0 %v76
  %325 = vmatprep.subr.mxu0 0.0
  %326 = vmatpush2.msra.mxu0 0.0
  %327 = vmatprep.subr.mxu0 0.0
  %328 = vmatpush2.msra.mxu0 0.0
  %329 = vmatprep.subr.mxu0 0.0
  %330 = vmatpush2.msra.mxu0 0.0
  %331 = vmatprep.subr.mxu0 0.0
  %332 = vmatpush2.msra.mxu0 0.0
  %333 = vmatprep.subr.mxu0 0.0
  %334 = vmatpush2.msra.mxu0 0.0
  %335 = vmatprep.subr.mxu0 0.0
  %336 = vmatpush2.msra.mxu0 0.0
  %337 = vmatprep.subr.mxu0 0.0
  %338 = vmatpush2.msra.mxu0 0.0
  %339 = vmatprep.subr.mxu0 0.0
  %340 = vmatpush2.msra.mxu0 0.0
  %341 = vmatprep.subr.mxu0 0.0
  %342 = vmatpush2.msra.mxu0 0.0
  %343 = vmatprep.subr.mxu0 0.0
  %344 = vmatpush2.msra.mxu0 0.0
  %345 = vmatprep.subr.mxu0 0.0
  %346 = vmatpush2.msra.mxu0 0.0
  %347 = vmatprep.subr.mxu0 0.0
  %348 = vmatpush2.msra.mxu0 0.0
  %349 = vmatprep.subr.mxu0 0.0
  %350 = vmatpush2.msra.mxu0 0.0
  %351 = vmatprep.subr.mxu0 0.0
  %352 = vmatpush2.msra.mxu0 0.0
  %353 = vmatprep.subr.mxu0 0.0
  %354 = vmatpush2.msra.mxu0 0.0
  %355 = vmatprep.subr.mxu0 0.0
  %356 = vmatpush2.msra.mxu0 0.0
  %357 = vmatprep.mubr.f32.mxu0 0.0
  %358 = vmatmul.mubr.f32.gmra.mxu0 %v288
  %v359 = vpop.f32.mrf.mxu0
  %v360 = vadd.f32 %v279, %v359
  %v361 = vpop.f32.mrf.mxu0
  %v362 = vadd.f32 %v279, %v361
  %363 = vmatprep.mubr.f32.mxu0 0.0
  %364 = vmatmul.mubr.f32.gmra.mxu0 %v291
  %v365 = vpop.f32.mrf.mxu0
  %v366 = vadd.f32 %v284, %v365
  %v367 = vpop.f32.mrf.mxu0
  %v368 = vadd.f32 %v284, %v367
  %369 = vdwg.mxu0
  %370 = vmatprep.subr.mxu0 0.0
  %371 = vmatpush1.msra.mxu0 0.0
  %372 = vmatprep.subr.mxu0 0.0
  %373 = vmatpush1.msra.mxu0 0.0
  %374 = vmatprep.subr.mxu0 0.0
  %375 = vmatpush1.msra.mxu0 0.0
  %376 = vmatprep.subr.mxu0 0.0
  %377 = vmatpush1.msra.mxu0 0.0
  %378 = vmatprep.subr.mxu0 0.0
  %379 = vmatpush1.msra.mxu0 0.0
  %380 = vmatprep.subr.mxu0 0.0
  %381 = vmatpush1.msra.mxu0 0.0
  %382 = vmatprep.subr.mxu0 0.0
  %383 = vmatpush1.msra.mxu0 0.0
  %384 = vmatprep.subr.mxu0 %v264
  %385 = vmatpush1.msra.mxu0 %v263
  %386 = vmatprep.subr.mxu0 %v236
  %387 = vmatpush1.msra.mxu0 %v235
  %388 = vmatprep.subr.mxu0 %v208
  %389 = vmatpush1.msra.mxu0 %v207
  %390 = vmatprep.subr.mxu0 %v179
  %391 = vmatpush1.msra.mxu0 %v178
  %392 = vmatprep.subr.mxu0 %v35
  %393 = vmatpush1.msra.mxu0 %v34
  %394 = vmatprep.subr.mxu0 %v153
  %395 = vmatpush1.msra.mxu0 %v152
  %396 = vmatprep.subr.mxu0 %v126
  %397 = vmatpush1.msra.mxu0 %v125
  %398 = vmatprep.subr.mxu0 %v97
  %399 = vmatpush1.msra.mxu0 %v96
  %400 = vmatprep.subr.mxu0 %v68
  %401 = vmatpush1.msra.mxu0 %v67
  %402 = vmatprep.subr.mxu0 0.0
  %403 = vmatpush2.msra.mxu0 0.0
  %404 = vmatprep.subr.mxu0 0.0
  %405 = vmatpush2.msra.mxu0 0.0
  %406 = vmatprep.subr.mxu0 0.0
  %407 = vmatpush2.msra.mxu0 0.0
  %408 = vmatprep.subr.mxu0 0.0
  %409 = vmatpush2.msra.mxu0 0.0
  %410 = vmatprep.subr.mxu0 0.0
  %411 = vmatpush2.msra.mxu0 0.0
  %412 = vmatprep.subr.mxu0 0.0
  %413 = vmatpush2.msra.mxu0 0.0
  %414 = vmatprep.subr.mxu0 0.0
  %415 = vmatpush2.msra.mxu0 0.0
  %416 = vmatprep.subr.mxu0 0.0
  %417 = vmatpush2.msra.mxu0 0.0
  %418 = vmatprep.subr.mxu0 0.0
  %419 = vmatpush2.msra.mxu0 0.0
  %420 = vmatprep.subr.mxu0 0.0
  %421 = vmatpush2.msra.mxu0 0.0
  %422 = vmatprep.subr.mxu0 0.0
  %423 = vmatpush2.msra.mxu0 0.0
  %424 = vmatprep.subr.mxu0 0.0
  %425 = vmatpush2.msra.mxu0 0.0
  %426 = vmatprep.subr.mxu0 0.0
  %427 = vmatpush2.msra.mxu0 0.0
  %428 = vmatprep.subr.mxu0 0.0
  %429 = vmatpush2.msra.mxu0 0.0
  %430 = vmatprep.subr.mxu0 0.0
  %431 = vmatpush2.msra.mxu0 0.0
  %432 = vmatprep.subr.mxu0 0.0
  %433 = vmatpush2.msra.mxu0 0.0
  %434 = vmatprep.mubr.f32.mxu0 0.0
  %435 = vmatmul.mubr.f32.gmra.mxu0 %v288
  %v436 = vpop.f32.mrf.mxu0
  %v437 = vadd.f32 %v279, %v436
  %v438 = vpop.f32.mrf.mxu0
  %v439 = vadd.f32 %v279, %v438
  %440 = vmatprep.mubr.f32.mxu0 0.0
  %441 = vmatmul.mubr.f32.gmra.mxu0 %v291
  %v442 = vpop.f32.mrf.mxu0
  %v443 = vadd.f32 %v284, %v442
  %v444 = vpop.f32.mrf.mxu0
  %v445 = vadd.f32 %v284, %v444
  %446 = vdwg.mxu0
  %447 = vmatprep.subr.mxu0 0.0
  %448 = vmatpush1.msra.mxu0 0.0
  %449 = vmatprep.subr.mxu0 0.0
  %450 = vmatpush1.msra.mxu0 0.0
  %451 = vmatprep.subr.mxu0 0.0
  %452 = vmatpush1.msra.mxu0 0.0
  %453 = vmatprep.subr.mxu0 0.0
  %454 = vmatpush1.msra.mxu0 0.0
  %455 = vmatprep.subr.mxu0 0.0
  %456 = vmatpush1.msra.mxu0 0.0
  %457 = vmatprep.subr.mxu0 0.0
  %458 = vmatpush1.msra.mxu0 0.0
  %459 = vmatprep.subr.mxu0 0.0
  %460 = vmatpush1.msra.mxu0 0.0
  %461 = vmatprep.subr.mxu0 %v272
  %462 = vmatpush1.msra.mxu0 %v275
  %463 = vmatprep.subr.mxu0 %v244
  %464 = vmatpush1.msra.mxu0 %v247
  %465 = vmatprep.subr.mxu0 %v216
  %466 = vmatpush1.msra.mxu0 %v219
  %467 = vmatprep.subr.mxu0 %v191
  %468 = vmatpush1.msra.mxu0 %v180
  %469 = vmatprep.subr.mxu0 %v37
  %470 = vmatpush1.msra.mxu0 %v36
  %471 = vmatprep.subr.mxu0 %v155
  %472 = vmatpush1.msra.mxu0 %v154
  %473 = vmatprep.subr.mxu0 %v122
  %474 = vmatpush1.msra.mxu0 %v127
  %475 = vmatprep.subr.mxu0 %v93
  %476 = vmatpush1.msra.mxu0 %v98
  %477 = vmatprep.subr.mxu0 %v64
  %478 = vmatpush1.msra.mxu0 %v69
  %479 = vmatprep.subr.mxu0 0.0
  %480 = vmatpush2.msra.mxu0 0.0
  %481 = vmatprep.subr.mxu0 0.0
  %482 = vmatpush2.msra.mxu0 0.0
  %483 = vmatprep.subr.mxu0 0.0
  %484 = vmatpush2.msra.mxu0 0.0
  %485 = vmatprep.subr.mxu0 0.0
  %486 = vmatpush2.msra.mxu0 0.0
  %487 = vmatprep.subr.mxu0 0.0
  %488 = vmatpush2.msra.mxu0 0.0
  %489 = vmatprep.subr.mxu0 0.0
  %490 = vmatpush2.msra.mxu0 0.0
  %491 = vmatprep.subr.mxu0 0.0
  %492 = vmatpush2.msra.mxu0 0.0
  %493 = vmatprep.subr.mxu0 0.0
  %494 = vmatpush2.msra.mxu0 0.0
  %495 = vmatprep.subr.mxu0 0.0
  %496 = vmatpush2.msra.mxu0 0.0
  %497 = vmatprep.subr.mxu0 0.0
  %498 = vmatpush2.msra.mxu0 0.0
  %499 = vmatprep.subr.mxu0 0.0
  %500 = vmatpush2.msra.mxu0 0.0
  %501 = vmatprep.subr.mxu0 0.0
  %502 = vmatpush2.msra.mxu0 0.0
  %503 = vmatprep.subr.mxu0 0.0
  %504 = vmatpush2.msra.mxu0 0.0
  %505 = vmatprep.subr.mxu0 0.0
  %506 = vmatpush2.msra.mxu0 0.0
  %507 = vmatprep.subr.mxu0 0.0
  %508 = vmatpush2.msra.mxu0 0.0
  %509 = vmatprep.subr.mxu0 0.0
  %510 = vmatpush2.msra.mxu0 0.0
  %511 = vmatprep.mubr.f32.mxu0 0.0
  %512 = vmatmul.mubr.f32.gmra.mxu0 %v288
  %v513 = vpop.f32.mrf.mxu0
  %v514 = vadd.f32 %v279, %v513
  %v515 = vpop.f32.mrf.mxu0
  %v516 = vadd.f32 %v279, %v515
  %517 = vmatprep.mubr.f32.mxu0 0.0
  %518 = vmatmul.mubr.f32.gmra.mxu0 %v291
  %v519 = vpop.f32.mrf.mxu0
  %v520 = vadd.f32 %v284, %v519
  %v521 = vpop.f32.mrf.mxu0
  %v522 = vadd.f32 %v284, %v521
  %523 = vdwg.mxu0
  %v524 = vmax.f32 %v360, 0.0
  %v525 = vmax.f32 %v362, 0.0
  %v526 = vmax.f32 %v437, 0.0
  %v527 = vmax.f32 %v439, 0.0
  %v528 = vmax.f32 %v514, 0.0
  %v529 = vmax.f32 %v516, 0.0
  %v530 = vmax.f32 %v366, 0.0
  %v531 = vmax.f32 %v368, 0.0
  %v532 = vmax.f32 %v443, 0.0
  %v533 = vmax.f32 %v445, 0.0
  %v534 = vmax.f32 %v520, 0.0
  %v535 = vmax.f32 %v522, 0.0
  %v537 = vlaneseq
  %v538 = vshrl.u32 %v537, 7
  %v539 = vsub.s32 0, %v538
  %v540 = vrot.slane %v31, %v539
  %v541 = vlaneseq
  %v542 = vshrl.u32 %v541, 7
  %v543 = vsub.s32 1, %v542
  %v544 = vrot.slane %v31, %v543
  %v545 = vlaneseq
  %v546 = vshrl.u32 %v545, 7
  %v547 = vsub.s32 2, %v546
  %v548 = vrot.slane %v31, %v547
  %v549 = vlaneseq
  %v550 = vshrl.u32 %v549, 7
  %v551 = vsub.s32 3, %v550
  %v552 = vrot.slane %v31, %v551
  %v553 = vlaneseq
  %v554 = vshrl.u32 %v553, 7
  %v555 = vsub.s32 4, %v554
  %v556 = vrot.slane %v31, %v555
  %v557 = vlaneseq
  %v558 = vshrl.u32 %v557, 7
  %v559 = vsub.s32 5, %v558
  %v560 = vrot.slane %v31, %v559
  %v567 = vmul.f32 %v524, %v540
  %v568 = vmul.f32 %v525, %v544
  %v569 = vmul.f32 %v526, %v548
  %v570 = vmul.f32 %v527, %v552
  %v571 = vmul.f32 %v528, %v556
  %v572 = vmul.f32 %v529, %v560
  %v573 = vmul.f32 %v530, %v540
  %v574 = vmul.f32 %v531, %v544
  %v575 = vmul.f32 %v532, %v548
  %v576 = vmul.f32 %v533, %v552
  %v577 = vmul.f32 %v534, %v556
  %v578 = vmul.f32 %v535, %v560
  %v579 = vld [vmem:[%s4] sm:$0xff]
  %v580 = vld [vmem:[%s4 + $0x8] sm:$0xff]
  %v581 = vld [vmem:[%s4 + $0x10] sm:$0xff]
  %v582 = vld [vmem:[%s4 + $0x18] sm:$0xff]
  %v583 = vld [vmem:[%s4 + $0x20] sm:$0xff]
  %v584 = vld [vmem:[%s4 + $0x28] sm:$0xff]
  %v585 = vld [vmem:[%s4 + $0x30] sm:$0xff]
  %v586 = vld [vmem:[%s4 + $0x38] sm:$0xff]
  %v587 = vld [vmem:[%s5] sm:$0xff]
  %v588 = vld [vmem:[%s5 + $0x8] sm:$0xff]
  %v589 = vld [vmem:[%s5 + $0x10] sm:$0xff]
  %v590 = vld [vmem:[%s5 + $0x18] sm:$0xff]
  %595 = vrot.lane.b32.xlu0 %v571, 11
  %v596 = vpop.permute.xlu0 %595
  %597 = vrot.lane.b32.xlu0 %v572, 11
  %v598 = vpop.permute.xlu0 %597
  %599 = vrot.lane.b32.xlu0 %v577, 11
  %v600 = vpop.permute.xlu0 %599
  %601 = vrot.lane.b32.xlu0 %v578, 11
  %v602 = vpop.permute.xlu0 %601
  %v603 = vsel %vm48, %v596, %v598
  %v604 = vsel %vm48, %v600, %v602
  %615 = vrot.lane.b32.xlu0 %v567, 19
  %v616 = vpop.permute.xlu0 %615
  %617 = vrot.lane.b32.xlu0 %v568, 19
  %v618 = vpop.permute.xlu0 %617
  %619 = vrot.lane.b32.xlu0 %v569, 19
  %v620 = vpop.permute.xlu0 %619
  %621 = vrot.lane.b32.xlu0 %v570, 19
  %v622 = vpop.permute.xlu0 %621
  %623 = vrot.lane.b32.xlu0 %v571, 19
  %v624 = vpop.permute.xlu0 %623
  %625 = vrot.lane.b32.xlu0 %v573, 19
  %v626 = vpop.permute.xlu0 %625
  %627 = vrot.lane.b32.xlu0 %v574, 19
  %v628 = vpop.permute.xlu0 %627
  %629 = vrot.lane.b32.xlu0 %v575, 19
  %v630 = vpop.permute.xlu0 %629
  %631 = vrot.lane.b32.xlu0 %v576, 19
  %v632 = vpop.permute.xlu0 %631
  %633 = vrot.lane.b32.xlu0 %v577, 19
  %v634 = vpop.permute.xlu0 %633
  %v635 = vsel %vm65, %v616, %v618
  %v636 = vsel %vm65, %v618, %v620
  %v637 = vsel %vm65, %v620, %v622
  %v638 = vsel %vm65, %v622, %v624
  %v639 = vsel %vm65, %v626, %v628
  %v640 = vsel %vm65, %v628, %v630
  %v641 = vsel %vm65, %v630, %v632
  %v642 = vsel %vm65, %v632, %v634
  %v655 = vsel %vm65, %v603, %v616
  %v656 = vsel %vm65, %v604, %v626
  %657 = vrot.lane.b32.xlu0 %v571, 10
  %v658 = vpop.permute.xlu0 %657
  %659 = vrot.lane.b32.xlu0 %v572, 10
  %v660 = vpop.permute.xlu0 %659
  %661 = vrot.lane.b32.xlu0 %v577, 10
  %v662 = vpop.permute.xlu0 %661
  %663 = vrot.lane.b32.xlu0 %v578, 10
  %v664 = vpop.permute.xlu0 %663
  %v665 = vsel %vm81, %v658, %v660
  %v666 = vsel %vm81, %v662, %v664
  %669 = vrot.lane.b32.xlu0 %v567, 18
  %v670 = vpop.permute.xlu0 %669
  %671 = vrot.lane.b32.xlu0 %v568, 18
  %v672 = vpop.permute.xlu0 %671
  %673 = vrot.lane.b32.xlu0 %v569, 18
  %v674 = vpop.permute.xlu0 %673
  %675 = vrot.lane.b32.xlu0 %v570, 18
  %v676 = vpop.permute.xlu0 %675
  %677 = vrot.lane.b32.xlu0 %v571, 18
  %v678 = vpop.permute.xlu0 %677
  %679 = vrot.lane.b32.xlu0 %v573, 18
  %v680 = vpop.permute.xlu0 %679
  %681 = vrot.lane.b32.xlu0 %v574, 18
  %v682 = vpop.permute.xlu0 %681
  %683 = vrot.lane.b32.xlu0 %v575, 18
  %v684 = vpop.permute.xlu0 %683
  %685 = vrot.lane.b32.xlu0 %v576, 18
  %v686 = vpop.permute.xlu0 %685
  %687 = vrot.lane.b32.xlu0 %v577, 18
  %v688 = vpop.permute.xlu0 %687
  %v689 = vsel %vm94, %v670, %v672
  %v690 = vsel %vm94, %v672, %v674
  %v691 = vsel %vm94, %v674, %v676
  %v692 = vsel %vm94, %v676, %v678
  %v693 = vsel %vm94, %v680, %v682
  %v694 = vsel %vm94, %v682, %v684
  %v695 = vsel %vm94, %v684, %v686
  %v696 = vsel %vm94, %v686, %v688
  %v709 = vsel %vm94, %v665, %v670
  %v710 = vsel %vm94, %v666, %v680
  %711 = vrot.lane.b32.xlu0 %v571, 9
  %v712 = vpop.permute.xlu0 %711
  %713 = vrot.lane.b32.xlu0 %v572, 9
  %v714 = vpop.permute.xlu0 %713
  %715 = vrot.lane.b32.xlu0 %v577, 9
  %v716 = vpop.permute.xlu0 %715
  %717 = vrot.lane.b32.xlu0 %v578, 9
  %v718 = vpop.permute.xlu0 %717
  %v719 = vsel %vm110, %v712, %v714
  %v720 = vsel %vm110, %v716, %v718
  %723 = vrot.lane.b32.xlu0 %v567, 17
  %v724 = vpop.permute.xlu0 %723
  %725 = vrot.lane.b32.xlu0 %v568, 17
  %v726 = vpop.permute.xlu0 %725
  %727 = vrot.lane.b32.xlu0 %v569, 17
  %v728 = vpop.permute.xlu0 %727
  %729 = vrot.lane.b32.xlu0 %v570, 17
  %v730 = vpop.permute.xlu0 %729
  %731 = vrot.lane.b32.xlu0 %v571, 17
  %v732 = vpop.permute.xlu0 %731
  %733 = vrot.lane.b32.xlu0 %v573, 17
  %v734 = vpop.permute.xlu0 %733
  %735 = vrot.lane.b32.xlu0 %v574, 17
  %v736 = vpop.permute.xlu0 %735
  %737 = vrot.lane.b32.xlu0 %v575, 17
  %v738 = vpop.permute.xlu0 %737
  %739 = vrot.lane.b32.xlu0 %v576, 17
  %v740 = vpop.permute.xlu0 %739
  %741 = vrot.lane.b32.xlu0 %v577, 17
  %v742 = vpop.permute.xlu0 %741
  %v743 = vsel %vm123, %v724, %v726
  %v744 = vsel %vm123, %v726, %v728
  %v745 = vsel %vm123, %v728, %v730
  %v746 = vsel %vm123, %v730, %v732
  %v747 = vsel %vm123, %v734, %v736
  %v748 = vsel %vm123, %v736, %v738
  %v749 = vsel %vm123, %v738, %v740
  %v750 = vsel %vm123, %v740, %v742
  %v763 = vsel %vm123, %v719, %v724
  %v764 = vsel %vm123, %v720, %v734
  %765 = vrot.lane.b32.xlu0 %v572, 121
  %v766 = vpop.permute.xlu0 %765
  %767 = vrot.lane.b32.xlu0 %v578, 121
  %v768 = vpop.permute.xlu0 %767
  %771 = vrot.lane.b32.xlu0 %v567, 1
  %v772 = vpop.permute.xlu0 %771
  %773 = vrot.lane.b32.xlu0 %v568, 1
  %v774 = vpop.permute.xlu0 %773
  %775 = vrot.lane.b32.xlu0 %v569, 1
  %v776 = vpop.permute.xlu0 %775
  %777 = vrot.lane.b32.xlu0 %v570, 1
  %v778 = vpop.permute.xlu0 %777
  %779 = vrot.lane.b32.xlu0 %v571, 1
  %v780 = vpop.permute.xlu0 %779
  %781 = vrot.lane.b32.xlu0 %v572, 1
  %v782 = vpop.permute.xlu0 %781
  %783 = vrot.lane.b32.xlu0 %v573, 1
  %v784 = vpop.permute.xlu0 %783
  %785 = vrot.lane.b32.xlu0 %v574, 1
  %v786 = vpop.permute.xlu0 %785
  %787 = vrot.lane.b32.xlu0 %v575, 1
  %v788 = vpop.permute.xlu0 %787
  %789 = vrot.lane.b32.xlu0 %v576, 1
  %v790 = vpop.permute.xlu0 %789
  %791 = vrot.lane.b32.xlu0 %v577, 1
  %v792 = vpop.permute.xlu0 %791
  %793 = vrot.lane.b32.xlu0 %v578, 1
  %v794 = vpop.permute.xlu0 %793
  %v795 = vsel %vm150, %v772, %v774
  %v796 = vsel %vm150, %v774, %v776
  %v797 = vsel %vm150, %v776, %v778
  %v798 = vsel %vm150, %v778, %v780
  %v799 = vsel %vm150, %v780, %v782
  %v800 = vsel %vm150, %v784, %v786
  %v801 = vsel %vm150, %v786, %v788
  %v802 = vsel %vm150, %v788, %v790
  %v803 = vsel %vm150, %v790, %v792
  %v804 = vsel %vm150, %v792, %v794
  %v817 = vsel %vm150, %v766, %v772
  %v818 = vsel %vm150, %v768, %v784
  %819 = vrot.lane.b32.xlu0 %v567, 127
  %v820 = vpop.permute.xlu0 %819
  %821 = vrot.lane.b32.xlu0 %v568, 127
  %v822 = vpop.permute.xlu0 %821
  %823 = vrot.lane.b32.xlu0 %v569, 127
  %v824 = vpop.permute.xlu0 %823
  %825 = vrot.lane.b32.xlu0 %v570, 127
  %v826 = vpop.permute.xlu0 %825
  %827 = vrot.lane.b32.xlu0 %v571, 127
  %v828 = vpop.permute.xlu0 %827
  %829 = vrot.lane.b32.xlu0 %v572, 127
  %v830 = vpop.permute.xlu0 %829
  %831 = vrot.lane.b32.xlu0 %v573, 127
  %v832 = vpop.permute.xlu0 %831
  %833 = vrot.lane.b32.xlu0 %v574, 127
  %v834 = vpop.permute.xlu0 %833
  %835 = vrot.lane.b32.xlu0 %v575, 127
  %v836 = vpop.permute.xlu0 %835
  %837 = vrot.lane.b32.xlu0 %v576, 127
  %v838 = vpop.permute.xlu0 %837
  %839 = vrot.lane.b32.xlu0 %v577, 127
  %v840 = vpop.permute.xlu0 %839
  %841 = vrot.lane.b32.xlu0 %v578, 127
  %v842 = vpop.permute.xlu0 %841
  %v843 = vsel %vm175, %v820, %v822
  %v844 = vsel %vm175, %v822, %v824
  %v845 = vsel %vm175, %v824, %v826
  %v846 = vsel %vm175, %v826, %v828
  %v847 = vsel %vm175, %v828, %v830
  %v848 = vsel %vm175, %v832, %v834
  %v849 = vsel %vm175, %v834, %v836
  %v850 = vsel %vm175, %v836, %v838
  %v851 = vsel %vm175, %v838, %v840
  %v852 = vsel %vm175, %v840, %v842
  %865 = vrot.lane.b32.xlu0 %v567, 7
  %v866 = vpop.permute.xlu0 %865
  %867 = vrot.lane.b32.xlu0 %v573, 7
  %v868 = vpop.permute.xlu0 %867
  %v871 = vsel %vm190, %v830, %v866
  %v872 = vsel %vm190, %v842, %v868
  %873 = vrot.lane.b32.xlu0 %v567, 111
  %v874 = vpop.permute.xlu0 %873
  %875 = vrot.lane.b32.xlu0 %v568, 111
  %v876 = vpop.permute.xlu0 %875
  %877 = vrot.lane.b32.xlu0 %v569, 111
  %v878 = vpop.permute.xlu0 %877
  %879 = vrot.lane.b32.xlu0 %v570, 111
  %v880 = vpop.permute.xlu0 %879
  %881 = vrot.lane.b32.xlu0 %v571, 111
  %v882 = vpop.permute.xlu0 %881
  %883 = vrot.lane.b32.xlu0 %v572, 111
  %v884 = vpop.permute.xlu0 %883
  %885 = vrot.lane.b32.xlu0 %v573, 111
  %v886 = vpop.permute.xlu0 %885
  %887 = vrot.lane.b32.xlu0 %v574, 111
  %v888 = vpop.permute.xlu0 %887
  %889 = vrot.lane.b32.xlu0 %v575, 111
  %v890 = vpop.permute.xlu0 %889
  %891 = vrot.lane.b32.xlu0 %v576, 111
  %v892 = vpop.permute.xlu0 %891
  %893 = vrot.lane.b32.xlu0 %v577, 111
  %v894 = vpop.permute.xlu0 %893
  %895 = vrot.lane.b32.xlu0 %v578, 111
  %v896 = vpop.permute.xlu0 %895
  %v897 = vsel %vm204, %v874, %v876
  %v898 = vsel %vm204, %v876, %v878
  %v899 = vsel %vm204, %v878, %v880
  %v900 = vsel %vm204, %v880, %v882
  %v901 = vsel %vm204, %v882, %v884
  %v902 = vsel %vm204, %v886, %v888
  %v903 = vsel %vm204, %v888, %v890
  %v904 = vsel %vm204, %v890, %v892
  %v905 = vsel %vm204, %v892, %v894
  %v906 = vsel %vm204, %v894, %v896
  %917 = vrot.lane.b32.xlu0 %v567, 119
  %v918 = vpop.permute.xlu0 %917
  %919 = vrot.lane.b32.xlu0 %v573, 119
  %v920 = vpop.permute.xlu0 %919
  %v923 = vsel %vm218, %v901, %v918
  %v924 = vsel %vm218, %v906, %v920
  %925 = vrot.lane.b32.xlu0 %v567, 110
  %v926 = vpop.permute.xlu0 %925
  %927 = vrot.lane.b32.xlu0 %v568, 110
  %v928 = vpop.permute.xlu0 %927
  %929 = vrot.lane.b32.xlu0 %v569, 110
  %v930 = vpop.permute.xlu0 %929
  %931 = vrot.lane.b32.xlu0 %v570, 110
  %v932 = vpop.permute.xlu0 %931
  %933 = vrot.lane.b32.xlu0 %v571, 110
  %v934 = vpop.permute.xlu0 %933
  %935 = vrot.lane.b32.xlu0 %v572, 110
  %v936 = vpop.permute.xlu0 %935
  %937 = vrot.lane.b32.xlu0 %v573, 110
  %v938 = vpop.permute.xlu0 %937
  %939 = vrot.lane.b32.xlu0 %v574, 110
  %v940 = vpop.permute.xlu0 %939
  %941 = vrot.lane.b32.xlu0 %v575, 110
  %v942 = vpop.permute.xlu0 %941
  %943 = vrot.lane.b32.xlu0 %v576, 110
  %v944 = vpop.permute.xlu0 %943
  %945 = vrot.lane.b32.xlu0 %v577, 110
  %v946 = vpop.permute.xlu0 %945
  %947 = vrot.lane.b32.xlu0 %v578, 110
  %v948 = vpop.permute.xlu0 %947
  %v949 = vsel %vm232, %v926, %v928
  %v950 = vsel %vm232, %v928, %v930
  %v951 = vsel %vm232, %v930, %v932
  %v952 = vsel %vm232, %v932, %v934
  %v953 = vsel %vm232, %v934, %v936
  %v954 = vsel %vm232, %v938, %v940
  %v955 = vsel %vm232, %v940, %v942
  %v956 = vsel %vm232, %v942, %v944
  %v957 = vsel %vm232, %v944, %v946
  %v958 = vsel %vm232, %v946, %v948
  %969 = vrot.lane.b32.xlu0 %v567, 118
  %v970 = vpop.permute.xlu0 %969
  %971 = vrot.lane.b32.xlu0 %v573, 118
  %v972 = vpop.permute.xlu0 %971
  %v975 = vsel %vm246, %v953, %v970
  %v976 = vsel %vm246, %v958, %v972
  %977 = vrot.lane.b32.xlu0 %v567, 109
  %v978 = vpop.permute.xlu0 %977
  %979 = vrot.lane.b32.xlu0 %v568, 109
  %v980 = vpop.permute.xlu0 %979
  %981 = vrot.lane.b32.xlu0 %v569, 109
  %v982 = vpop.permute.xlu0 %981
  %983 = vrot.lane.b32.xlu0 %v570, 109
  %v984 = vpop.permute.xlu0 %983
  %985 = vrot.lane.b32.xlu0 %v571, 109
  %v986 = vpop.permute.xlu0 %985
  %987 = vrot.lane.b32.xlu0 %v572, 109
  %v988 = vpop.permute.xlu0 %987
  %989 = vrot.lane.b32.xlu0 %v573, 109
  %v990 = vpop.permute.xlu0 %989
  %991 = vrot.lane.b32.xlu0 %v574, 109
  %v992 = vpop.permute.xlu0 %991
  %993 = vrot.lane.b32.xlu0 %v575, 109
  %v994 = vpop.permute.xlu0 %993
  %995 = vrot.lane.b32.xlu0 %v576, 109
  %v996 = vpop.permute.xlu0 %995
  %997 = vrot.lane.b32.xlu0 %v577, 109
  %v998 = vpop.permute.xlu0 %997
  %999 = vrot.lane.b32.xlu0 %v578, 109
  %v1000 = vpop.permute.xlu0 %999
  %v1001 = vsel %vm260, %v978, %v980
  %v1002 = vsel %vm260, %v980, %v982
  %v1003 = vsel %vm260, %v982, %v984
  %v1004 = vsel %vm260, %v984, %v986
  %v1005 = vsel %vm260, %v986, %v988
  %v1006 = vsel %vm260, %v990, %v992
  %v1007 = vsel %vm260, %v992, %v994
  %v1008 = vsel %vm260, %v994, %v996
  %v1009 = vsel %vm260, %v996, %v998
  %v1010 = vsel %vm260, %v998, %v1000
  %1021 = vrot.lane.b32.xlu0 %v567, 117
  %v1022 = vpop.permute.xlu0 %1021
  %1023 = vrot.lane.b32.xlu0 %v573, 117
  %v1024 = vpop.permute.xlu0 %1023
  %v1027 = vsel %vm274, %v1005, %v1022
  %v1028 = vsel %vm274, %v1010, %v1024
  %1030 = vset.pattern.permute.xlu0 0
  %1031 = vperm.xlu0 %1030, %v587
  %v1032 = vpop.permute.xlu0 %1031
  %1035 = vset.pattern.permute.xlu0 0
  %1036 = vperm.xlu0 %1035, %v588
  %v1037 = vpop.permute.xlu0 %1036
  %1040 = vset.pattern.permute.xlu0 0
  %1041 = vperm.xlu0 %1040, %v589
  %v1042 = vpop.permute.xlu0 %1041
  %1045 = vset.pattern.permute.xlu0 0
  %1046 = vperm.xlu0 %1045, %v590
  %v1047 = vpop.permute.xlu0 %1046
  %vm1049 = vcmask 130048
  %v1051 = vsel %vm1049, %v580, 0
  %v1054 = vsel %vm1049, %v582, 0
  %v1057 = vsel %vm1049, %v584, 0
  %v1060 = vsel %vm1049, %v586, 0
  %1062 = vmatprep.subr.mxu0 %v955
  %1063 = vmatpush1.msra.mxu0 %v954
  %1064 = vmatprep.subr.mxu0 %v950
  %1065 = vmatpush1.msra.mxu0 %v949
  %1066 = vmatprep.subr.mxu0 %v903
  %1067 = vmatpush1.msra.mxu0 %v902
  %1068 = vmatprep.subr.mxu0 %v898
  %1069 = vmatpush1.msra.mxu0 %v897
  %1070 = vmatprep.subr.mxu0 %v849
  %1071 = vmatpush1.msra.mxu0 %v848
  %1072 = vmatprep.subr.mxu0 %v844
  %1073 = vmatpush1.msra.mxu0 %v843
  %1074 = vmatprep.subr.mxu0 %v574
  %1075 = vmatpush1.msra.mxu0 %v573
  %1076 = vmatprep.subr.mxu0 %v568
  %1077 = vmatpush1.msra.mxu0 %v567
  %1078 = vmatprep.subr.mxu0 %v800
  %1079 = vmatpush1.msra.mxu0 %v818
  %1080 = vmatprep.subr.mxu0 %v795
  %1081 = vmatpush1.msra.mxu0 %v817
  %1082 = vmatprep.subr.mxu0 %v747
  %1083 = vmatpush1.msra.mxu0 %v764
  %1084 = vmatprep.subr.mxu0 %v743
  %1085 = vmatpush1.msra.mxu0 %v763
  %1086 = vmatprep.subr.mxu0 %v693
  %1087 = vmatpush1.msra.mxu0 %v710
  %1088 = vmatprep.subr.mxu0 %v689
  %1089 = vmatpush1.msra.mxu0 %v709
  %1090 = vmatprep.subr.mxu0 %v639
  %1091 = vmatpush1.msra.mxu0 %v656
  %1092 = vmatprep.subr.mxu0 %v635
  %1093 = vmatpush1.msra.mxu0 %v655
  %1094 = vmatprep.subr.mxu0 0.0
  %1095 = vmatpush2.msra.mxu0 0.0
  %1096 = vmatprep.subr.mxu0 0.0
  %1097 = vmatpush2.msra.mxu0 0.0
  %1098 = vmatprep.subr.mxu0 0.0
  %1099 = vmatpush2.msra.mxu0 0.0
  %1100 = vmatprep.subr.mxu0 0.0
  %1101 = vmatpush2.msra.mxu0 0.0
  %1102 = vmatprep.subr.mxu0 0.0
  %1103 = vmatpush2.msra.mxu0 0.0
  %1104 = vmatprep.subr.mxu0 0.0
  %1105 = vmatpush2.msra.mxu0 0.0
  %1106 = vmatprep.subr.mxu0 0.0
  %1107 = vmatpush2.msra.mxu0 0.0
  %1108 = vmatprep.subr.mxu0 0.0
  %1109 = vmatpush2.msra.mxu0 0.0
  %1110 = vmatprep.subr.mxu0 0.0
  %1111 = vmatpush2.msra.mxu0 0.0
  %1112 = vmatprep.subr.mxu0 0.0
  %1113 = vmatpush2.msra.mxu0 0.0
  %1114 = vmatprep.subr.mxu0 0.0
  %1115 = vmatpush2.msra.mxu0 0.0
  %1116 = vmatprep.subr.mxu0 0.0
  %1117 = vmatpush2.msra.mxu0 0.0
  %1118 = vmatprep.subr.mxu0 0.0
  %1119 = vmatpush2.msra.mxu0 0.0
  %1120 = vmatprep.subr.mxu0 0.0
  %1121 = vmatpush2.msra.mxu0 0.0
  %1122 = vmatprep.subr.mxu0 %v1007
  %1123 = vmatpush2.msra.mxu0 %v1006
  %1124 = vmatprep.subr.mxu0 %v1002
  %1125 = vmatpush2.msra.mxu0 %v1001
  %1126 = vmatprep.mubr.f32.mxu0 %v1051
  %1127 = vmatmul.mubr.f32.gmra.mxu0 %v579
  %v1128 = vpop.f32.mrf.mxu0
  %v1129 = vadd.f32 %v1032, %v1128
  %v1130 = vpop.f32.mrf.mxu0
  %v1131 = vadd.f32 %v1032, %v1130
  %1132 = vmatprep.mubr.f32.mxu0 %v1054
  %1133 = vmatmul.mubr.f32.gmra.mxu0 %v581
  %v1134 = vpop.f32.mrf.mxu0
  %v1135 = vadd.f32 %v1037, %v1134
  %v1136 = vpop.f32.mrf.mxu0
  %v1137 = vadd.f32 %v1037, %v1136
  %1138 = vmatprep.mubr.f32.mxu0 %v1057
  %1139 = vmatmul.mubr.f32.gmra.mxu0 %v583
  %v1140 = vpop.f32.mrf.mxu0
  %v1141 = vadd.f32 %v1042, %v1140
  %v1142 = vpop.f32.mrf.mxu0
  %v1143 = vadd.f32 %v1042, %v1142
  %1144 = vmatprep.mubr.f32.mxu0 %v1060
  %1145 = vmatmul.mubr.f32.gmra.mxu0 %v585
  %v1146 = vpop.f32.mrf.mxu0
  %v1147 = vadd.f32 %v1047, %v1146
  %v1148 = vpop.f32.mrf.mxu0
  %v1149 = vadd.f32 %v1047, %v1148
  %1150 = vdwg.mxu0
  %1151 = vmatprep.subr.mxu0 %v957
  %1152 = vmatpush1.msra.mxu0 %v956
  %1153 = vmatprep.subr.mxu0 %v952
  %1154 = vmatpush1.msra.mxu0 %v951
  %1155 = vmatprep.subr.mxu0 %v905
  %1156 = vmatpush1.msra.mxu0 %v904
  %1157 = vmatprep.subr.mxu0 %v900
  %1158 = vmatpush1.msra.mxu0 %v899
  %1159 = vmatprep.subr.mxu0 %v851
  %1160 = vmatpush1.msra.mxu0 %v850
  %1161 = vmatprep.subr.mxu0 %v846
  %1162 = vmatpush1.msra.mxu0 %v845
  %1163 = vmatprep.subr.mxu0 %v576
  %1164 = vmatpush1.msra.mxu0 %v575
  %1165 = vmatprep.subr.mxu0 %v570
  %1166 = vmatpush1.msra.mxu0 %v569
  %1167 = vmatprep.subr.mxu0 %v802
  %1168 = vmatpush1.msra.mxu0 %v801
  %1169 = vmatprep.subr.mxu0 %v797
  %1170 = vmatpush1.msra.mxu0 %v796
  %1171 = vmatprep.subr.mxu0 %v749
  %1172 = vmatpush1.msra.mxu0 %v748
  %1173 = vmatprep.subr.mxu0 %v745
  %1174 = vmatpush1.msra.mxu0 %v744
  %1175 = vmatprep.subr.mxu0 %v695
  %1176 = vmatpush1.msra.mxu0 %v694
  %1177 = vmatprep.subr.mxu0 %v691
  %1178 = vmatpush1.msra.mxu0 %v690
  %1179 = vmatprep.subr.mxu0 %v641
  %1180 = vmatpush1.msra.mxu0 %v640
  %1181 = vmatprep.subr.mxu0 %v637
  %1182 = vmatpush1.msra.mxu0 %v636
  %1183 = vmatprep.subr.mxu0 0.0
  %1184 = vmatpush2.msra.mxu0 0.0
  %1185 = vmatprep.subr.mxu0 0.0
  %1186 = vmatpush2.msra.mxu0 0.0
  %1187 = vmatprep.subr.mxu0 0.0
  %1188 = vmatpush2.msra.mxu0 0.0
  %1189 = vmatprep.subr.mxu0 0.0
  %1190 = vmatpush2.msra.mxu0 0.0
  %1191 = vmatprep.subr.mxu0 0.0
  %1192 = vmatpush2.msra.mxu0 0.0
  %1193 = vmatprep.subr.mxu0 0.0
  %1194 = vmatpush2.msra.mxu0 0.0
  %1195 = vmatprep.subr.mxu0 0.0
  %1196 = vmatpush2.msra.mxu0 0.0
  %1197 = vmatprep.subr.mxu0 0.0
  %1198 = vmatpush2.msra.mxu0 0.0
  %1199 = vmatprep.subr.mxu0 0.0
  %1200 = vmatpush2.msra.mxu0 0.0
  %1201 = vmatprep.subr.mxu0 0.0
  %1202 = vmatpush2.msra.mxu0 0.0
  %1203 = vmatprep.subr.mxu0 0.0
  %1204 = vmatpush2.msra.mxu0 0.0
  %1205 = vmatprep.subr.mxu0 0.0
  %1206 = vmatpush2.msra.mxu0 0.0
  %1207 = vmatprep.subr.mxu0 0.0
  %1208 = vmatpush2.msra.mxu0 0.0
  %1209 = vmatprep.subr.mxu0 0.0
  %1210 = vmatpush2.msra.mxu0 0.0
  %1211 = vmatprep.subr.mxu0 %v1009
  %1212 = vmatpush2.msra.mxu0 %v1008
  %1213 = vmatprep.subr.mxu0 %v1004
  %1214 = vmatpush2.msra.mxu0 %v1003
  %1215 = vmatprep.mubr.f32.mxu0 %v1051
  %1216 = vmatmul.mubr.f32.gmra.mxu0 %v579
  %v1217 = vpop.f32.mrf.mxu0
  %v1218 = vadd.f32 %v1032, %v1217
  %v1219 = vpop.f32.mrf.mxu0
  %v1220 = vadd.f32 %v1032, %v1219
  %1221 = vmatprep.mubr.f32.mxu0 %v1054
  %1222 = vmatmul.mubr.f32.gmra.mxu0 %v581
  %v1223 = vpop.f32.mrf.mxu0
  %v1224 = vadd.f32 %v1037, %v1223
  %v1225 = vpop.f32.mrf.mxu0
  %v1226 = vadd.f32 %v1037, %v1225
  %1227 = vmatprep.mubr.f32.mxu0 %v1057
  %1228 = vmatmul.mubr.f32.gmra.mxu0 %v583
  %v1229 = vpop.f32.mrf.mxu0
  %v1230 = vadd.f32 %v1042, %v1229
  %v1231 = vpop.f32.mrf.mxu0
  %v1232 = vadd.f32 %v1042, %v1231
  %1233 = vmatprep.mubr.f32.mxu0 %v1060
  %1234 = vmatmul.mubr.f32.gmra.mxu0 %v585
  %v1235 = vpop.f32.mrf.mxu0
  %v1236 = vadd.f32 %v1047, %v1235
  %v1237 = vpop.f32.mrf.mxu0
  %v1238 = vadd.f32 %v1047, %v1237
  %1239 = vdwg.mxu0
  %1240 = vmatprep.subr.mxu0 %v972
  %1241 = vmatpush1.msra.mxu0 %v976
  %1242 = vmatprep.subr.mxu0 %v970
  %1243 = vmatpush1.msra.mxu0 %v975
  %1244 = vmatprep.subr.mxu0 %v920
  %1245 = vmatpush1.msra.mxu0 %v924
  %1246 = vmatprep.subr.mxu0 %v918
  %1247 = vmatpush1.msra.mxu0 %v923
  %1248 = vmatprep.subr.mxu0 %v872
  %1249 = vmatpush1.msra.mxu0 %v852
  %1250 = vmatprep.subr.mxu0 %v871
  %1251 = vmatpush1.msra.mxu0 %v847
  %1252 = vmatprep.subr.mxu0 %v578
  %1253 = vmatpush1.msra.mxu0 %v577
  %1254 = vmatprep.subr.mxu0 %v572
  %1255 = vmatpush1.msra.mxu0 %v571
  %1256 = vmatprep.subr.mxu0 %v804
  %1257 = vmatpush1.msra.mxu0 %v803
  %1258 = vmatprep.subr.mxu0 %v799
  %1259 = vmatpush1.msra.mxu0 %v798
  %1260 = vmatprep.subr.mxu0 %v742
  %1261 = vmatpush1.msra.mxu0 %v750
  %1262 = vmatprep.subr.mxu0 %v732
  %1263 = vmatpush1.msra.mxu0 %v746
  %1264 = vmatprep.subr.mxu0 %v688
  %1265 = vmatpush1.msra.mxu0 %v696
  %1266 = vmatprep.subr.mxu0 %v678
  %1267 = vmatpush1.msra.mxu0 %v692
  %1268 = vmatprep.subr.mxu0 %v634
  %1269 = vmatpush1.msra.mxu0 %v642
  %1270 = vmatprep.subr.mxu0 %v624
  %1271 = vmatpush1.msra.mxu0 %v638
  %1272 = vmatprep.subr.mxu0 0.0
  %1273 = vmatpush2.msra.mxu0 0.0
  %1274 = vmatprep.subr.mxu0 0.0
  %1275 = vmatpush2.msra.mxu0 0.0
  %1276 = vmatprep.subr.mxu0 0.0
  %1277 = vmatpush2.msra.mxu0 0.0
  %1278 = vmatprep.subr.mxu0 0.0
  %1279 = vmatpush2.msra.mxu0 0.0
  %1280 = vmatprep.subr.mxu0 0.0
  %1281 = vmatpush2.msra.mxu0 0.0
  %1282 = vmatprep.subr.mxu0 0.0
  %1283 = vmatpush2.msra.mxu0 0.0
  %1284 = vmatprep.subr.mxu0 0.0
  %1285 = vmatpush2.msra.mxu0 0.0
  %1286 = vmatprep.subr.mxu0 0.0
  %1287 = vmatpush2.msra.mxu0 0.0
  %1288 = vmatprep.subr.mxu0 0.0
  %1289 = vmatpush2.msra.mxu0 0.0
  %1290 = vmatprep.subr.mxu0 0.0
  %1291 = vmatpush2.msra.mxu0 0.0
  %1292 = vmatprep.subr.mxu0 0.0
  %1293 = vmatpush2.msra.mxu0 0.0
  %1294 = vmatprep.subr.mxu0 0.0
  %1295 = vmatpush2.msra.mxu0 0.0
  %1296 = vmatprep.subr.mxu0 0.0
  %1297 = vmatpush2.msra.mxu0 0.0
  %1298 = vmatprep.subr.mxu0 0.0
  %1299 = vmatpush2.msra.mxu0 0.0
  %1300 = vmatprep.subr.mxu0 %v1024
  %1301 = vmatpush2.msra.mxu0 %v1028
  %1302 = vmatprep.subr.mxu0 %v1022
  %1303 = vmatpush2.msra.mxu0 %v1027
  %1304 = vmatprep.mubr.f32.mxu0 %v1051
  %1305 = vmatmul.mubr.f32.gmra.mxu0 %v579
  %v1306 = vpop.f32.mrf.mxu0
  %v1307 = vadd.f32 %v1032, %v1306
  %v1308 = vpop.f32.mrf.mxu0
  %v1309 = vadd.f32 %v1032, %v1308
  %1310 = vmatprep.mubr.f32.mxu0 %v1054
  %1311 = vmatmul.mubr.f32.gmra.mxu0 %v581
  %v1312 = vpop.f32.mrf.mxu0
  %v1313 = vadd.f32 %v1037, %v1312
  %v1314 = vpop.f32.mrf.mxu0
  %v1315 = vadd.f32 %v1037, %v1314
  %1316 = vmatprep.mubr.f32.mxu0 %v1057
  %1317 = vmatmul.mubr.f32.gmra.mxu0 %v583
  %v1318 = vpop.f32.mrf.mxu0
  %v1319 = vadd.f32 %v1042, %v1318
  %v1320 = vpop.f32.mrf.mxu0
  %v1321 = vadd.f32 %v1042, %v1320
  %1322 = vmatprep.mubr.f32.mxu0 %v1060
  %1323 = vmatmul.mubr.f32.gmra.mxu0 %v585
  %v1324 = vpop.f32.mrf.mxu0
  %v1325 = vadd.f32 %v1047, %v1324
  %v1326 = vpop.f32.mrf.mxu0
  %v1327 = vadd.f32 %v1047, %v1326
  %1328 = vdwg.mxu0
  %v1329 = vmax.f32 %v1129, 0.0
  %v1330 = vmax.f32 %v1131, 0.0
  %v1331 = vmax.f32 %v1218, 0.0
  %v1332 = vmax.f32 %v1220, 0.0
  %v1333 = vmax.f32 %v1307, 0.0
  %v1334 = vmax.f32 %v1309, 0.0
  %v1335 = vmax.f32 %v1135, 0.0
  %v1336 = vmax.f32 %v1137, 0.0
  %v1337 = vmax.f32 %v1224, 0.0
  %v1338 = vmax.f32 %v1226, 0.0
  %v1339 = vmax.f32 %v1313, 0.0
  %v1340 = vmax.f32 %v1315, 0.0
  %v1341 = vmax.f32 %v1141, 0.0
  %v1342 = vmax.f32 %v1143, 0.0
  %v1343 = vmax.f32 %v1230, 0.0
  %v1344 = vmax.f32 %v1232, 0.0
  %v1345 = vmax.f32 %v1319, 0.0
  %v1346 = vmax.f32 %v1321, 0.0
  %v1347 = vmax.f32 %v1147, 0.0
  %v1348 = vmax.f32 %v1149, 0.0
  %v1349 = vmax.f32 %v1236, 0.0
  %v1350 = vmax.f32 %v1238, 0.0
  %v1351 = vmax.f32 %v1325, 0.0
  %v1352 = vmax.f32 %v1327, 0.0
  %v1353 = vmul.f32 %v1329, %v540
  %v1354 = vmul.f32 %v1330, %v544
  %v1355 = vmul.f32 %v1331, %v548
  %v1356 = vmul.f32 %v1332, %v552
  %v1357 = vmul.f32 %v1333, %v556
  %v1358 = vmul.f32 %v1334, %v560
  %v1359 = vmul.f32 %v1335, %v540
  %v1360 = vmul.f32 %v1336, %v544
  %v1361 = vmul.f32 %v1337, %v548
  %v1362 = vmul.f32 %v1338, %v552
  %v1363 = vmul.f32 %v1339, %v556
  %v1364 = vmul.f32 %v1340, %v560
  %v1365 = vmul.f32 %v1341, %v540
  %v1366 = vmul.f32 %v1342, %v544
  %v1367 = vmul.f32 %v1343, %v548
  %v1368 = vmul.f32 %v1344, %v552
  %v1369 = vmul.f32 %v1345, %v556
  %v1370 = vmul.f32 %v1346, %v560
  %v1371 = vmul.f32 %v1347, %v540
  %v1372 = vmul.f32 %v1348, %v544
  %v1373 = vmul.f32 %v1349, %v548
  %v1374 = vmul.f32 %v1350, %v552
  %v1375 = vmul.f32 %v1351, %v556
  %v1376 = vmul.f32 %v1352, %v560
  %v1377 = vld [vmem:[%s6] sm:$0x7]
  %v1378 = vld [vmem:[#allocation2] sm:$0x1]
  %1387 = vrot.lane.b32.xlu0 %v1357, 11
  %v1388 = vpop.permute.xlu0 %1387
  %1389 = vrot.lane.b32.xlu0 %v1358, 11
  %v1390 = vpop.permute.xlu0 %1389
  %1391 = vrot.lane.b32.xlu0 %v1363, 11
  %v1392 = vpop.permute.xlu0 %1391
  %1393 = vrot.lane.b32.xlu0 %v1364, 11
  %v1394 = vpop.permute.xlu0 %1393
  %1395 = vrot.lane.b32.xlu0 %v1369, 11
  %v1396 = vpop.permute.xlu0 %1395
  %1397 = vrot.lane.b32.xlu0 %v1370, 11
  %v1398 = vpop.permute.xlu0 %1397
  %1399 = vrot.lane.b32.xlu0 %v1375, 11
  %v1400 = vpop.permute.xlu0 %1399
  %1401 = vrot.lane.b32.xlu0 %v1376, 11
  %v1402 = vpop.permute.xlu0 %1401
  %v1403 = vsel %vm48, %v1388, %v1390
  %v1404 = vsel %vm48, %v1392, %v1394
  %v1405 = vsel %vm48, %v1396, %v1398
  %v1406 = vsel %vm48, %v1400, %v1402
  %1427 = vrot.lane.b32.xlu0 %v1353, 19
  %v1428 = vpop.permute.xlu0 %1427
  %1429 = vrot.lane.b32.xlu0 %v1354, 19
  %v1430 = vpop.permute.xlu0 %1429
  %1431 = vrot.lane.b32.xlu0 %v1355, 19
  %v1432 = vpop.permute.xlu0 %1431
  %1433 = vrot.lane.b32.xlu0 %v1356, 19
  %v1434 = vpop.permute.xlu0 %1433
  %1435 = vrot.lane.b32.xlu0 %v1357, 19
  %v1436 = vpop.permute.xlu0 %1435
  %1437 = vrot.lane.b32.xlu0 %v1359, 19
  %v1438 = vpop.permute.xlu0 %1437
  %1439 = vrot.lane.b32.xlu0 %v1360, 19
  %v1440 = vpop.permute.xlu0 %1439
  %1441 = vrot.lane.b32.xlu0 %v1361, 19
  %v1442 = vpop.permute.xlu0 %1441
  %1443 = vrot.lane.b32.xlu0 %v1362, 19
  %v1444 = vpop.permute.xlu0 %1443
  %1445 = vrot.lane.b32.xlu0 %v1363, 19
  %v1446 = vpop.permute.xlu0 %1445
  %1447 = vrot.lane.b32.xlu0 %v1365, 19
  %v1448 = vpop.permute.xlu0 %1447
  %1449 = vrot.lane.b32.xlu0 %v1366, 19
  %v1450 = vpop.permute.xlu0 %1449
  %1451 = vrot.lane.b32.xlu0 %v1367, 19
  %v1452 = vpop.permute.xlu0 %1451
  %1453 = vrot.lane.b32.xlu0 %v1368, 19
  %v1454 = vpop.permute.xlu0 %1453
  %1455 = vrot.lane.b32.xlu0 %v1369, 19
  %v1456 = vpop.permute.xlu0 %1455
  %1457 = vrot.lane.b32.xlu0 %v1371, 19
  %v1458 = vpop.permute.xlu0 %1457
  %1459 = vrot.lane.b32.xlu0 %v1372, 19
  %v1460 = vpop.permute.xlu0 %1459
  %1461 = vrot.lane.b32.xlu0 %v1373, 19
  %v1462 = vpop.permute.xlu0 %1461
  %1463 = vrot.lane.b32.xlu0 %v1374, 19
  %v1464 = vpop.permute.xlu0 %1463
  %1465 = vrot.lane.b32.xlu0 %v1375, 19
  %v1466 = vpop.permute.xlu0 %1465
  %v1467 = vsel %vm65, %v1428, %v1430
  %v1468 = vsel %vm65, %v1430, %v1432
  %v1469 = vsel %vm65, %v1432, %v1434
  %v1470 = vsel %vm65, %v1434, %v1436
  %v1471 = vsel %vm65, %v1438, %v1440
  %v1472 = vsel %vm65, %v1440, %v1442
  %v1473 = vsel %vm65, %v1442, %v1444
  %v1474 = vsel %vm65, %v1444, %v1446
  %v1475 = vsel %vm65, %v1448, %v1450
  %v1476 = vsel %vm65, %v1450, %v1452
  %v1477 = vsel %vm65, %v1452, %v1454
  %v1478 = vsel %vm65, %v1454, %v1456
  %v1479 = vsel %vm65, %v1458, %v1460
  %v1480 = vsel %vm65, %v1460, %v1462
  %v1481 = vsel %vm65, %v1462, %v1464
  %v1482 = vsel %vm65, %v1464, %v1466
  %v1507 = vsel %vm65, %v1403, %v1428
  %v1508 = vsel %vm65, %v1404, %v1438
  %v1509 = vsel %vm65, %v1405, %v1448
  %v1510 = vsel %vm65, %v1406, %v1458
  %1511 = vrot.lane.b32.xlu0 %v1357, 10
  %v1512 = vpop.permute.xlu0 %1511
  %1513 = vrot.lane.b32.xlu0 %v1358, 10
  %v1514 = vpop.permute.xlu0 %1513
  %1515 = vrot.lane.b32.xlu0 %v1363, 10
  %v1516 = vpop.permute.xlu0 %1515
  %1517 = vrot.lane.b32.xlu0 %v1364, 10
  %v1518 = vpop.permute.xlu0 %1517
  %1519 = vrot.lane.b32.xlu0 %v1369, 10
  %v1520 = vpop.permute.xlu0 %1519
  %1521 = vrot.lane.b32.xlu0 %v1370, 10
  %v1522 = vpop.permute.xlu0 %1521
  %1523 = vrot.lane.b32.xlu0 %v1375, 10
  %v1524 = vpop.permute.xlu0 %1523
  %1525 = vrot.lane.b32.xlu0 %v1376, 10
  %v1526 = vpop.permute.xlu0 %1525
  %v1527 = vsel %vm81, %v1512, %v1514
  %v1528 = vsel %vm81, %v1516, %v1518
  %v1529 = vsel %vm81, %v1520, %v1522
  %v1530 = vsel %vm81, %v1524, %v1526
  %1535 = vrot.lane.b32.xlu0 %v1353, 18
  %v1536 = vpop.permute.xlu0 %1535
  %1537 = vrot.lane.b32.xlu0 %v1354, 18
  %v1538 = vpop.permute.xlu0 %1537
  %1539 = vrot.lane.b32.xlu0 %v1355, 18
  %v1540 = vpop.permute.xlu0 %1539
  %1541 = vrot.lane.b32.xlu0 %v1356, 18
  %v1542 = vpop.permute.xlu0 %1541
  %1543 = vrot.lane.b32.xlu0 %v1357, 18
  %v1544 = vpop.permute.xlu0 %1543
  %1545 = vrot.lane.b32.xlu0 %v1359, 18
  %v1546 = vpop.permute.xlu0 %1545
  %1547 = vrot.lane.b32.xlu0 %v1360, 18
  %v1548 = vpop.permute.xlu0 %1547
  %1549 = vrot.lane.b32.xlu0 %v1361, 18
  %v1550 = vpop.permute.xlu0 %1549
  %1551 = vrot.lane.b32.xlu0 %v1362, 18
  %v1552 = vpop.permute.xlu0 %1551
  %1553 = vrot.lane.b32.xlu0 %v1363, 18
  %v1554 = vpop.permute.xlu0 %1553
  %1555 = vrot.lane.b32.xlu0 %v1365, 18
  %v1556 = vpop.permute.xlu0 %1555
  %1557 = vrot.lane.b32.xlu0 %v1366, 18
  %v1558 = vpop.permute.xlu0 %1557
  %1559 = vrot.lane.b32.xlu0 %v1367, 18
  %v1560 = vpop.permute.xlu0 %1559
  %1561 = vrot.lane.b32.xlu0 %v1368, 18
  %v1562 = vpop.permute.xlu0 %1561
  %1563 = vrot.lane.b32.xlu0 %v1369, 18
  %v1564 = vpop.permute.xlu0 %1563
  %1565 = vrot.lane.b32.xlu0 %v1371, 18
  %v1566 = vpop.permute.xlu0 %1565
  %1567 = vrot.lane.b32.xlu0 %v1372, 18
  %v1568 = vpop.permute.xlu0 %1567
  %1569 = vrot.lane.b32.xlu0 %v1373, 18
  %v1570 = vpop.permute.xlu0 %1569
  %1571 = vrot.lane.b32.xlu0 %v1374, 18
  %v1572 = vpop.permute.xlu0 %1571
  %1573 = vrot.lane.b32.xlu0 %v1375, 18
  %v1574 = vpop.permute.xlu0 %1573
  %v1575 = vsel %vm94, %v1536, %v1538
  %v1576 = vsel %vm94, %v1538, %v1540
  %v1577 = vsel %vm94, %v1540, %v1542
  %v1578 = vsel %vm94, %v1542, %v1544
  %v1579 = vsel %vm94, %v1546, %v1548
  %v1580 = vsel %vm94, %v1548, %v1550
  %v1581 = vsel %vm94, %v1550, %v1552
  %v1582 = vsel %vm94, %v1552, %v1554
  %v1583 = vsel %vm94, %v1556, %v1558
  %v1584 = vsel %vm94, %v1558, %v1560
  %v1585 = vsel %vm94, %v1560, %v1562
  %v1586 = vsel %vm94, %v1562, %v1564
  %v1587 = vsel %vm94, %v1566, %v1568
  %v1588 = vsel %vm94, %v1568, %v1570
  %v1589 = vsel %vm94, %v1570, %v1572
  %v1590 = vsel %vm94, %v1572, %v1574
  %v1615 = vsel %vm94, %v1527, %v1536
  %v1616 = vsel %vm94, %v1528, %v1546
  %v1617 = vsel %vm94, %v1529, %v1556
  %v1618 = vsel %vm94, %v1530, %v1566
  %1619 = vrot.lane.b32.xlu0 %v1357, 9
  %v1620 = vpop.permute.xlu0 %1619
  %1621 = vrot.lane.b32.xlu0 %v1358, 9
  %v1622 = vpop.permute.xlu0 %1621
  %1623 = vrot.lane.b32.xlu0 %v1363, 9
  %v1624 = vpop.permute.xlu0 %1623
  %1625 = vrot.lane.b32.xlu0 %v1364, 9
  %v1626 = vpop.permute.xlu0 %1625
  %1627 = vrot.lane.b32.xlu0 %v1369, 9
  %v1628 = vpop.permute.xlu0 %1627
  %1629 = vrot.lane.b32.xlu0 %v1370, 9
  %v1630 = vpop.permute.xlu0 %1629
  %1631 = vrot.lane.b32.xlu0 %v1375, 9
  %v1632 = vpop.permute.xlu0 %1631
  %1633 = vrot.lane.b32.xlu0 %v1376, 9
  %v1634 = vpop.permute.xlu0 %1633
  %v1635 = vsel %vm110, %v1620, %v1622
  %v1636 = vsel %vm110, %v1624, %v1626
  %v1637 = vsel %vm110, %v1628, %v1630
  %v1638 = vsel %vm110, %v1632, %v1634
  %1643 = vrot.lane.b32.xlu0 %v1353, 17
  %v1644 = vpop.permute.xlu0 %1643
  %1645 = vrot.lane.b32.xlu0 %v1354, 17
  %v1646 = vpop.permute.xlu0 %1645
  %1647 = vrot.lane.b32.xlu0 %v1355, 17
  %v1648 = vpop.permute.xlu0 %1647
  %1649 = vrot.lane.b32.xlu0 %v1356, 17
  %v1650 = vpop.permute.xlu0 %1649
  %1651 = vrot.lane.b32.xlu0 %v1357, 17
  %v1652 = vpop.permute.xlu0 %1651
  %1653 = vrot.lane.b32.xlu0 %v1359, 17
  %v1654 = vpop.permute.xlu0 %1653
  %1655 = vrot.lane.b32.xlu0 %v1360, 17
  %v1656 = vpop.permute.xlu0 %1655
  %1657 = vrot.lane.b32.xlu0 %v1361, 17
  %v1658 = vpop.permute.xlu0 %1657
  %1659 = vrot.lane.b32.xlu0 %v1362, 17
  %v1660 = vpop.permute.xlu0 %1659
  %1661 = vrot.lane.b32.xlu0 %v1363, 17
  %v1662 = vpop.permute.xlu0 %1661
  %1663 = vrot.lane.b32.xlu0 %v1365, 17
  %v1664 = vpop.permute.xlu0 %1663
  %1665 = vrot.lane.b32.xlu0 %v1366, 17
  %v1666 = vpop.permute.xlu0 %1665
  %1667 = vrot.lane.b32.xlu0 %v1367, 17
  %v1668 = vpop.permute.xlu0 %1667
  %1669 = vrot.lane.b32.xlu0 %v1368, 17
  %v1670 = vpop.permute.xlu0 %1669
  %1671 = vrot.lane.b32.xlu0 %v1369, 17
  %v1672 = vpop.permute.xlu0 %1671
  %1673 = vrot.lane.b32.xlu0 %v1371, 17
  %v1674 = vpop.permute.xlu0 %1673
  %1675 = vrot.lane.b32.xlu0 %v1372, 17
  %v1676 = vpop.permute.xlu0 %1675
  %1677 = vrot.lane.b32.xlu0 %v1373, 17
  %v1678 = vpop.permute.xlu0 %1677
  %1679 = vrot.lane.b32.xlu0 %v1374, 17
  %v1680 = vpop.permute.xlu0 %1679
  %1681 = vrot.lane.b32.xlu0 %v1375, 17
  %v1682 = vpop.permute.xlu0 %1681
  %v1683 = vsel %vm123, %v1644, %v1646
  %v1684 = vsel %vm123, %v1646, %v1648
  %v1685 = vsel %vm123, %v1648, %v1650
  %v1686 = vsel %vm123, %v1650, %v1652
  %v1687 = vsel %vm123, %v1654, %v1656
  %v1688 = vsel %vm123, %v1656, %v1658
  %v1689 = vsel %vm123, %v1658, %v1660
  %v1690 = vsel %vm123, %v1660, %v1662
  %v1691 = vsel %vm123, %v1664, %v1666
  %v1692 = vsel %vm123, %v1666, %v1668
  %v1693 = vsel %vm123, %v1668, %v1670
  %v1694 = vsel %vm123, %v1670, %v1672
  %v1695 = vsel %vm123, %v1674, %v1676
  %v1696 = vsel %vm123, %v1676, %v1678
  %v1697 = vsel %vm123, %v1678, %v1680
  %v1698 = vsel %vm123, %v1680, %v1682
  %v1723 = vsel %vm123, %v1635, %v1644
  %v1724 = vsel %vm123, %v1636, %v1654
  %v1725 = vsel %vm123, %v1637, %v1664
  %v1726 = vsel %vm123, %v1638, %v1674
  %1727 = vrot.lane.b32.xlu0 %v1358, 121
  %v1728 = vpop.permute.xlu0 %1727
  %1729 = vrot.lane.b32.xlu0 %v1364, 121
  %v1730 = vpop.permute.xlu0 %1729
  %1731 = vrot.lane.b32.xlu0 %v1370, 121
  %v1732 = vpop.permute.xlu0 %1731
  %1733 = vrot.lane.b32.xlu0 %v1376, 121
  %v1734 = vpop.permute.xlu0 %1733
  %1739 = vrot.lane.b32.xlu0 %v1353, 1
  %v1740 = vpop.permute.xlu0 %1739
  %1741 = vrot.lane.b32.xlu0 %v1354, 1
  %v1742 = vpop.permute.xlu0 %1741
  %1743 = vrot.lane.b32.xlu0 %v1355, 1
  %v1744 = vpop.permute.xlu0 %1743
  %1745 = vrot.lane.b32.xlu0 %v1356, 1
  %v1746 = vpop.permute.xlu0 %1745
  %1747 = vrot.lane.b32.xlu0 %v1357, 1
  %v1748 = vpop.permute.xlu0 %1747
  %1749 = vrot.lane.b32.xlu0 %v1358, 1
  %v1750 = vpop.permute.xlu0 %1749
  %1751 = vrot.lane.b32.xlu0 %v1359, 1
  %v1752 = vpop.permute.xlu0 %1751
  %1753 = vrot.lane.b32.xlu0 %v1360, 1
  %v1754 = vpop.permute.xlu0 %1753
  %1755 = vrot.lane.b32.xlu0 %v1361, 1
  %v1756 = vpop.permute.xlu0 %1755
  %1757 = vrot.lane.b32.xlu0 %v1362, 1
  %v1758 = vpop.permute.xlu0 %1757
  %1759 = vrot.lane.b32.xlu0 %v1363, 1
  %v1760 = vpop.permute.xlu0 %1759
  %1761 = vrot.lane.b32.xlu0 %v1364, 1
  %v1762 = vpop.permute.xlu0 %1761
  %1763 = vrot.lane.b32.xlu0 %v1365, 1
  %v1764 = vpop.permute.xlu0 %1763
  %1765 = vrot.lane.b32.xlu0 %v1366, 1
  %v1766 = vpop.permute.xlu0 %1765
  %1767 = vrot.lane.b32.xlu0 %v1367, 1
  %v1768 = vpop.permute.xlu0 %1767
  %1769 = vrot.lane.b32.xlu0 %v1368, 1
  %v1770 = vpop.permute.xlu0 %1769
  %1771 = vrot.lane.b32.xlu0 %v1369, 1
  %v1772 = vpop.permute.xlu0 %1771
  %1773 = vrot.lane.b32.xlu0 %v1370, 1
  %v1774 = vpop.permute.xlu0 %1773
  %1775 = vrot.lane.b32.xlu0 %v1371, 1
  %v1776 = vpop.permute.xlu0 %1775
  %1777 = vrot.lane.b32.xlu0 %v1372, 1
  %v1778 = vpop.permute.xlu0 %1777
  %1779 = vrot.lane.b32.xlu0 %v1373, 1
  %v1780 = vpop.permute.xlu0 %1779
  %1781 = vrot.lane.b32.xlu0 %v1374, 1
  %v1782 = vpop.permute.xlu0 %1781
  %1783 = vrot.lane.b32.xlu0 %v1375, 1
  %v1784 = vpop.permute.xlu0 %1783
  %1785 = vrot.lane.b32.xlu0 %v1376, 1
  %v1786 = vpop.permute.xlu0 %1785
  %v1787 = vsel %vm150, %v1740, %v1742
  %v1788 = vsel %vm150, %v1742, %v1744
  %v1789 = vsel %vm150, %v1744, %v1746
  %v1790 = vsel %vm150, %v1746, %v1748
  %v1791 = vsel %vm150, %v1748, %v1750
  %v1792 = vsel %vm150, %v1752, %v1754
  %v1793 = vsel %vm150, %v1754, %v1756
  %v1794 = vsel %vm150, %v1756, %v1758
  %v1795 = vsel %vm150, %v1758, %v1760
  %v1796 = vsel %vm150, %v1760, %v1762
  %v1797 = vsel %vm150, %v1764, %v1766
  %v1798 = vsel %vm150, %v1766, %v1768
  %v1799 = vsel %vm150, %v1768, %v1770
  %v1800 = vsel %vm150, %v1770, %v1772
  %v1801 = vsel %vm150, %v1772, %v1774
  %v1802 = vsel %vm150, %v1776, %v1778
  %v1803 = vsel %vm150, %v1778, %v1780
  %v1804 = vsel %vm150, %v1780, %v1782
  %v1805 = vsel %vm150, %v1782, %v1784
  %v1806 = vsel %vm150, %v1784, %v1786
  %v1831 = vsel %vm150, %v1728, %v1740
  %v1832 = vsel %vm150, %v1730, %v1752
  %v1833 = vsel %vm150, %v1732, %v1764
  %v1834 = vsel %vm150, %v1734, %v1776
  %1835 = vrot.lane.b32.xlu0 %v1353, 127
  %v1836 = vpop.permute.xlu0 %1835
  %1837 = vrot.lane.b32.xlu0 %v1354, 127
  %v1838 = vpop.permute.xlu0 %1837
  %1839 = vrot.lane.b32.xlu0 %v1355, 127
  %v1840 = vpop.permute.xlu0 %1839
  %1841 = vrot.lane.b32.xlu0 %v1356, 127
  %v1842 = vpop.permute.xlu0 %1841
  %1843 = vrot.lane.b32.xlu0 %v1357, 127
  %v1844 = vpop.permute.xlu0 %1843
  %1845 = vrot.lane.b32.xlu0 %v1358, 127
  %v1846 = vpop.permute.xlu0 %1845
  %1847 = vrot.lane.b32.xlu0 %v1359, 127
  %v1848 = vpop.permute.xlu0 %1847
  %1849 = vrot.lane.b32.xlu0 %v1360, 127
  %v1850 = vpop.permute.xlu0 %1849
  %1851 = vrot.lane.b32.xlu0 %v1361, 127
  %v1852 = vpop.permute.xlu0 %1851
  %1853 = vrot.lane.b32.xlu0 %v1362, 127
  %v1854 = vpop.permute.xlu0 %1853
  %1855 = vrot.lane.b32.xlu0 %v1363, 127
  %v1856 = vpop.permute.xlu0 %1855
  %1857 = vrot.lane.b32.xlu0 %v1364, 127
  %v1858 = vpop.permute.xlu0 %1857
  %1859 = vrot.lane.b32.xlu0 %v1365, 127
  %v1860 = vpop.permute.xlu0 %1859
  %1861 = vrot.lane.b32.xlu0 %v1366, 127
  %v1862 = vpop.permute.xlu0 %1861
  %1863 = vrot.lane.b32.xlu0 %v1367, 127
  %v1864 = vpop.permute.xlu0 %1863
  %1865 = vrot.lane.b32.xlu0 %v1368, 127
  %v1866 = vpop.permute.xlu0 %1865
  %1867 = vrot.lane.b32.xlu0 %v1369, 127
  %v1868 = vpop.permute.xlu0 %1867
  %1869 = vrot.lane.b32.xlu0 %v1370, 127
  %v1870 = vpop.permute.xlu0 %1869
  %1871 = vrot.lane.b32.xlu0 %v1371, 127
  %v1872 = vpop.permute.xlu0 %1871
  %1873 = vrot.lane.b32.xlu0 %v1372, 127
  %v1874 = vpop.permute.xlu0 %1873
  %1875 = vrot.lane.b32.xlu0 %v1373, 127
  %v1876 = vpop.permute.xlu0 %1875
  %1877 = vrot.lane.b32.xlu0 %v1374, 127
  %v1878 = vpop.permute.xlu0 %1877
  %1879 = vrot.lane.b32.xlu0 %v1375, 127
  %v1880 = vpop.permute.xlu0 %1879
  %1881 = vrot.lane.b32.xlu0 %v1376, 127
  %v1882 = vpop.permute.xlu0 %1881
  %v1883 = vsel %vm175, %v1836, %v1838
  %v1884 = vsel %vm175, %v1838, %v1840
  %v1885 = vsel %vm175, %v1840, %v1842
  %v1886 = vsel %vm175, %v1842, %v1844
  %v1887 = vsel %vm175, %v1844, %v1846
  %v1888 = vsel %vm175, %v1848, %v1850
  %v1889 = vsel %vm175, %v1850, %v1852
  %v1890 = vsel %vm175, %v1852, %v1854
  %v1891 = vsel %vm175, %v1854, %v1856
  %v1892 = vsel %vm175, %v1856, %v1858
  %v1893 = vsel %vm175, %v1860, %v1862
  %v1894 = vsel %vm175, %v1862, %v1864
  %v1895 = vsel %vm175, %v1864, %v1866
  %v1896 = vsel %vm175, %v1866, %v1868
  %v1897 = vsel %vm175, %v1868, %v1870
  %v1898 = vsel %vm175, %v1872, %v1874
  %v1899 = vsel %vm175, %v1874, %v1876
  %v1900 = vsel %vm175, %v1876, %v1878
  %v1901 = vsel %vm175, %v1878, %v1880
  %v1902 = vsel %vm175, %v1880, %v1882
  %1927 = vrot.lane.b32.xlu0 %v1353, 7
  %v1928 = vpop.permute.xlu0 %1927
  %1929 = vrot.lane.b32.xlu0 %v1359, 7
  %v1930 = vpop.permute.xlu0 %1929
  %1931 = vrot.lane.b32.xlu0 %v1365, 7
  %v1932 = vpop.permute.xlu0 %1931
  %1933 = vrot.lane.b32.xlu0 %v1371, 7
  %v1934 = vpop.permute.xlu0 %1933
  %v1939 = vsel %vm190, %v1846, %v1928
  %v1940 = vsel %vm190, %v1858, %v1930
  %v1941 = vsel %vm190, %v1870, %v1932
  %v1942 = vsel %vm190, %v1882, %v1934
  %1943 = vrot.lane.b32.xlu0 %v1353, 111
  %v1944 = vpop.permute.xlu0 %1943
  %1945 = vrot.lane.b32.xlu0 %v1354, 111
  %v1946 = vpop.permute.xlu0 %1945
  %1947 = vrot.lane.b32.xlu0 %v1355, 111
  %v1948 = vpop.permute.xlu0 %1947
  %1949 = vrot.lane.b32.xlu0 %v1356, 111
  %v1950 = vpop.permute.xlu0 %1949
  %1951 = vrot.lane.b32.xlu0 %v1357, 111
  %v1952 = vpop.permute.xlu0 %1951
  %1953 = vrot.lane.b32.xlu0 %v1358, 111
  %v1954 = vpop.permute.xlu0 %1953
  %1955 = vrot.lane.b32.xlu0 %v1359, 111
  %v1956 = vpop.permute.xlu0 %1955
  %1957 = vrot.lane.b32.xlu0 %v1360, 111
  %v1958 = vpop.permute.xlu0 %1957
  %1959 = vrot.lane.b32.xlu0 %v1361, 111
  %v1960 = vpop.permute.xlu0 %1959
  %1961 = vrot.lane.b32.xlu0 %v1362, 111
  %v1962 = vpop.permute.xlu0 %1961
  %1963 = vrot.lane.b32.xlu0 %v1363, 111
  %v1964 = vpop.permute.xlu0 %1963
  %1965 = vrot.lane.b32.xlu0 %v1364, 111
  %v1966 = vpop.permute.xlu0 %1965
  %1967 = vrot.lane.b32.xlu0 %v1365, 111
  %v1968 = vpop.permute.xlu0 %1967
  %1969 = vrot.lane.b32.xlu0 %v1366, 111
  %v1970 = vpop.permute.xlu0 %1969
  %1971 = vrot.lane.b32.xlu0 %v1367, 111
  %v1972 = vpop.permute.xlu0 %1971
  %1973 = vrot.lane.b32.xlu0 %v1368, 111
  %v1974 = vpop.permute.xlu0 %1973
  %1975 = vrot.lane.b32.xlu0 %v1369, 111
  %v1976 = vpop.permute.xlu0 %1975
  %1977 = vrot.lane.b32.xlu0 %v1370, 111
  %v1978 = vpop.permute.xlu0 %1977
  %1979 = vrot.lane.b32.xlu0 %v1371, 111
  %v1980 = vpop.permute.xlu0 %1979
  %1981 = vrot.lane.b32.xlu0 %v1372, 111
  %v1982 = vpop.permute.xlu0 %1981
  %1983 = vrot.lane.b32.xlu0 %v1373, 111
  %v1984 = vpop.permute.xlu0 %1983
  %1985 = vrot.lane.b32.xlu0 %v1374, 111
  %v1986 = vpop.permute.xlu0 %1985
  %1987 = vrot.lane.b32.xlu0 %v1375, 111
  %v1988 = vpop.permute.xlu0 %1987
  %1989 = vrot.lane.b32.xlu0 %v1376, 111
  %v1990 = vpop.permute.xlu0 %1989
  %v1991 = vsel %vm204, %v1944, %v1946
  %v1992 = vsel %vm204, %v1946, %v1948
  %v1993 = vsel %vm204, %v1948, %v1950
  %v1994 = vsel %vm204, %v1950, %v1952
  %v1995 = vsel %vm204, %v1952, %v1954
  %v1996 = vsel %vm204, %v1956, %v1958
  %v1997 = vsel %vm204, %v1958, %v1960
  %v1998 = vsel %vm204, %v1960, %v1962
  %v1999 = vsel %vm204, %v1962, %v1964
  %v2000 = vsel %vm204, %v1964, %v1966
  %v2001 = vsel %vm204, %v1968, %v1970
  %v2002 = vsel %vm204, %v1970, %v1972
  %v2003 = vsel %vm204, %v1972, %v1974
  %v2004 = vsel %vm204, %v1974, %v1976
  %v2005 = vsel %vm204, %v1976, %v1978
  %v2006 = vsel %vm204, %v1980, %v1982
  %v2007 = vsel %vm204, %v1982, %v1984
  %v2008 = vsel %vm204, %v1984, %v1986
  %v2009 = vsel %vm204, %v1986, %v1988
  %v2010 = vsel %vm204, %v1988, %v1990
  %2031 = vrot.lane.b32.xlu0 %v1353, 119
  %v2032 = vpop.permute.xlu0 %2031
  %2033 = vrot.lane.b32.xlu0 %v1359, 119
  %v2034 = vpop.permute.xlu0 %2033
  %2035 = vrot.lane.b32.xlu0 %v1365, 119
  %v2036 = vpop.permute.xlu0 %2035
  %2037 = vrot.lane.b32.xlu0 %v1371, 119
  %v2038 = vpop.permute.xlu0 %2037
  %v2043 = vsel %vm218, %v1995, %v2032
  %v2044 = vsel %vm218, %v2000, %v2034
  %v2045 = vsel %vm218, %v2005, %v2036
  %v2046 = vsel %vm218, %v2010, %v2038
  %2047 = vrot.lane.b32.xlu0 %v1353, 110
  %v2048 = vpop.permute.xlu0 %2047
  %2049 = vrot.lane.b32.xlu0 %v1354, 110
  %v2050 = vpop.permute.xlu0 %2049
  %2051 = vrot.lane.b32.xlu0 %v1355, 110
  %v2052 = vpop.permute.xlu0 %2051
  %2053 = vrot.lane.b32.xlu0 %v1356, 110
  %v2054 = vpop.permute.xlu0 %2053
  %2055 = vrot.lane.b32.xlu0 %v1357, 110
  %v2056 = vpop.permute.xlu0 %2055
  %2057 = vrot.lane.b32.xlu0 %v1358, 110
  %v2058 = vpop.permute.xlu0 %2057
  %2059 = vrot.lane.b32.xlu0 %v1359, 110
  %v2060 = vpop.permute.xlu0 %2059
  %2061 = vrot.lane.b32.xlu0 %v1360, 110
  %v2062 = vpop.permute.xlu0 %2061
  %2063 = vrot.lane.b32.xlu0 %v1361, 110
  %v2064 = vpop.permute.xlu0 %2063
  %2065 = vrot.lane.b32.xlu0 %v1362, 110
  %v2066 = vpop.permute.xlu0 %2065
  %2067 = vrot.lane.b32.xlu0 %v1363, 110
  %v2068 = vpop.permute.xlu0 %2067
  %2069 = vrot.lane.b32.xlu0 %v1364, 110
  %v2070 = vpop.permute.xlu0 %2069
  %2071 = vrot.lane.b32.xlu0 %v1365, 110
  %v2072 = vpop.permute.xlu0 %2071
  %2073 = vrot.lane.b32.xlu0 %v1366, 110
  %v2074 = vpop.permute.xlu0 %2073
  %2075 = vrot.lane.b32.xlu0 %v1367, 110
  %v2076 = vpop.permute.xlu0 %2075
  %2077 = vrot.lane.b32.xlu0 %v1368, 110
  %v2078 = vpop.permute.xlu0 %2077
  %2079 = vrot.lane.b32.xlu0 %v1369, 110
  %v2080 = vpop.permute.xlu0 %2079
  %2081 = vrot.lane.b32.xlu0 %v1370, 110
  %v2082 = vpop.permute.xlu0 %2081
  %2083 = vrot.lane.b32.xlu0 %v1371, 110
  %v2084 = vpop.permute.xlu0 %2083
  %2085 = vrot.lane.b32.xlu0 %v1372, 110
  %v2086 = vpop.permute.xlu0 %2085
  %2087 = vrot.lane.b32.xlu0 %v1373, 110
  %v2088 = vpop.permute.xlu0 %2087
  %2089 = vrot.lane.b32.xlu0 %v1374, 110
  %v2090 = vpop.permute.xlu0 %2089
  %2091 = vrot.lane.b32.xlu0 %v1375, 110
  %v2092 = vpop.permute.xlu0 %2091
  %2093 = vrot.lane.b32.xlu0 %v1376, 110
  %v2094 = vpop.permute.xlu0 %2093
  %v2095 = vsel %vm232, %v2048, %v2050
  %v2096 = vsel %vm232, %v2050, %v2052
  %v2097 = vsel %vm232, %v2052, %v2054
  %v2098 = vsel %vm232, %v2054, %v2056
  %v2099 = vsel %vm232, %v2056, %v2058
  %v2100 = vsel %vm232, %v2060, %v2062
  %v2101 = vsel %vm232, %v2062, %v2064
  %v2102 = vsel %vm232, %v2064, %v2066
  %v2103 = vsel %vm232, %v2066, %v2068
  %v2104 = vsel %vm232, %v2068, %v2070
  %v2105 = vsel %vm232, %v2072, %v2074
  %v2106 = vsel %vm232, %v2074, %v2076
  %v2107 = vsel %vm232, %v2076, %v2078
  %v2108 = vsel %vm232, %v2078, %v2080
  %v2109 = vsel %vm232, %v2080, %v2082
  %v2110 = vsel %vm232, %v2084, %v2086
  %v2111 = vsel %vm232, %v2086, %v2088
  %v2112 = vsel %vm232, %v2088, %v2090
  %v2113 = vsel %vm232, %v2090, %v2092
  %v2114 = vsel %vm232, %v2092, %v2094
  %2135 = vrot.lane.b32.xlu0 %v1353, 118
  %v2136 = vpop.permute.xlu0 %2135
  %2137 = vrot.lane.b32.xlu0 %v1359, 118
  %v2138 = vpop.permute.xlu0 %2137
  %2139 = vrot.lane.b32.xlu0 %v1365, 118
  %v2140 = vpop.permute.xlu0 %2139
  %2141 = vrot.lane.b32.xlu0 %v1371, 118
  %v2142 = vpop.permute.xlu0 %2141
  %v2147 = vsel %vm246, %v2099, %v2136
  %v2148 = vsel %vm246, %v2104, %v2138
  %v2149 = vsel %vm246, %v2109, %v2140
  %v2150 = vsel %vm246, %v2114, %v2142
  %2151 = vrot.lane.b32.xlu0 %v1353, 109
  %v2152 = vpop.permute.xlu0 %2151
  %2153 = vrot.lane.b32.xlu0 %v1354, 109
  %v2154 = vpop.permute.xlu0 %2153
  %2155 = vrot.lane.b32.xlu0 %v1355, 109
  %v2156 = vpop.permute.xlu0 %2155
  %2157 = vrot.lane.b32.xlu0 %v1356, 109
  %v2158 = vpop.permute.xlu0 %2157
  %2159 = vrot.lane.b32.xlu0 %v1357, 109
  %v2160 = vpop.permute.xlu0 %2159
  %2161 = vrot.lane.b32.xlu0 %v1358, 109
  %v2162 = vpop.permute.xlu0 %2161
  %2163 = vrot.lane.b32.xlu0 %v1359, 109
  %v2164 = vpop.permute.xlu0 %2163
  %2165 = vrot.lane.b32.xlu0 %v1360, 109
  %v2166 = vpop.permute.xlu0 %2165
  %2167 = vrot.lane.b32.xlu0 %v1361, 109
  %v2168 = vpop.permute.xlu0 %2167
  %2169 = vrot.lane.b32.xlu0 %v1362, 109
  %v2170 = vpop.permute.xlu0 %2169
  %2171 = vrot.lane.b32.xlu0 %v1363, 109
  %v2172 = vpop.permute.xlu0 %2171
  %2173 = vrot.lane.b32.xlu0 %v1364, 109
  %v2174 = vpop.permute.xlu0 %2173
  %2175 = vrot.lane.b32.xlu0 %v1365, 109
  %v2176 = vpop.permute.xlu0 %2175
  %2177 = vrot.lane.b32.xlu0 %v1366, 109
  %v2178 = vpop.permute.xlu0 %2177
  %2179 = vrot.lane.b32.xlu0 %v1367, 109
  %v2180 = vpop.permute.xlu0 %2179
  %2181 = vrot.lane.b32.xlu0 %v1368, 109
  %v2182 = vpop.permute.xlu0 %2181
  %2183 = vrot.lane.b32.xlu0 %v1369, 109
  %v2184 = vpop.permute.xlu0 %2183
  %2185 = vrot.lane.b32.xlu0 %v1370, 109
  %v2186 = vpop.permute.xlu0 %2185
  %2187 = vrot.lane.b32.xlu0 %v1371, 109
  %v2188 = vpop.permute.xlu0 %2187
  %2189 = vrot.lane.b32.xlu0 %v1372, 109
  %v2190 = vpop.permute.xlu0 %2189
  %2191 = vrot.lane.b32.xlu0 %v1373, 109
  %v2192 = vpop.permute.xlu0 %2191
  %2193 = vrot.lane.b32.xlu0 %v1374, 109
  %v2194 = vpop.permute.xlu0 %2193
  %2195 = vrot.lane.b32.xlu0 %v1375, 109
  %v2196 = vpop.permute.xlu0 %2195
  %2197 = vrot.lane.b32.xlu0 %v1376, 109
  %v2198 = vpop.permute.xlu0 %2197
  %v2199 = vsel %vm260, %v2152, %v2154
  %v2200 = vsel %vm260, %v2154, %v2156
  %v2201 = vsel %vm260, %v2156, %v2158
  %v2202 = vsel %vm260, %v2158, %v2160
  %v2203 = vsel %vm260, %v2160, %v2162
  %v2204 = vsel %vm260, %v2164, %v2166
  %v2205 = vsel %vm260, %v2166, %v2168
  %v2206 = vsel %vm260, %v2168, %v2170
  %v2207 = vsel %vm260, %v2170, %v2172
  %v2208 = vsel %vm260, %v2172, %v2174
  %v2209 = vsel %vm260, %v2176, %v2178
  %v2210 = vsel %vm260, %v2178, %v2180
  %v2211 = vsel %vm260, %v2180, %v2182
  %v2212 = vsel %vm260, %v2182, %v2184
  %v2213 = vsel %vm260, %v2184, %v2186
  %v2214 = vsel %vm260, %v2188, %v2190
  %v2215 = vsel %vm260, %v2190, %v2192
  %v2216 = vsel %vm260, %v2192, %v2194
  %v2217 = vsel %vm260, %v2194, %v2196
  %v2218 = vsel %vm260, %v2196, %v2198
  %2239 = vrot.lane.b32.xlu0 %v1353, 117
  %v2240 = vpop.permute.xlu0 %2239
  %2241 = vrot.lane.b32.xlu0 %v1359, 117
  %v2242 = vpop.permute.xlu0 %2241
  %2243 = vrot.lane.b32.xlu0 %v1365, 117
  %v2244 = vpop.permute.xlu0 %2243
  %2245 = vrot.lane.b32.xlu0 %v1371, 117
  %v2246 = vpop.permute.xlu0 %2245
  %v2251 = vsel %vm274, %v2203, %v2240
  %v2252 = vsel %vm274, %v2208, %v2242
  %v2253 = vsel %vm274, %v2213, %v2244
  %v2254 = vsel %vm274, %v2218, %v2246
  %2256 = vset.pattern.permute.xlu0 0
  %2257 = vperm.xlu0 %2256, %v1378
  %v2258 = vpop.permute.xlu0 %2257
  %v2260 = vlaneseq
  %v2261 = vshrl.u32 %v2260, 7
  %v2262 = vsub.s32 0, %v2261
  %v2263 = vrot.slane %v2258, %v2262
  %v2265 = vlaneseq
  %v2266 = vshrl.u32 %v2265, 7
  %v2267 = vsub.s32 0, %v2266
  %v2268 = vrot.slane %v1377, %v2267
  %v2269 = vlaneseq
  %v2270 = vshrl.u32 %v2269, 7
  %v2271 = vsub.s32 1, %v2270
  %v2272 = vrot.slane %v1377, %v2271
  %v2273 = vlaneseq
  %v2274 = vshrl.u32 %v2273, 7
  %v2275 = vsub.s32 2, %v2274
  %v2276 = vrot.slane %v1377, %v2275
  %vm2279 = vcmask 261120
  %v2280 = vsel %vm2279, %v2276, 0
  %2282 = vmatprep.subr.mxu0 %v1802
  %2283 = vmatpush1.msra.mxu0 %v1834
  %2284 = vmatprep.subr.mxu0 %v1797
  %2285 = vmatpush1.msra.mxu0 %v1833
  %2286 = vmatprep.subr.mxu0 %v1792
  %2287 = vmatpush1.msra.mxu0 %v1832
  %2288 = vmatprep.subr.mxu0 %v1787
  %2289 = vmatpush1.msra.mxu0 %v1831
  %2290 = vmatprep.subr.mxu0 %v1695
  %2291 = vmatpush1.msra.mxu0 %v1726
  %2292 = vmatprep.subr.mxu0 %v1691
  %2293 = vmatpush1.msra.mxu0 %v1725
  %2294 = vmatprep.subr.mxu0 %v1687
  %2295 = vmatpush1.msra.mxu0 %v1724
  %2296 = vmatprep.subr.mxu0 %v1683
  %2297 = vmatpush1.msra.mxu0 %v1723
  %2298 = vmatprep.subr.mxu0 %v1587
  %2299 = vmatpush1.msra.mxu0 %v1618
  %2300 = vmatprep.subr.mxu0 %v1583
  %2301 = vmatpush1.msra.mxu0 %v1617
  %2302 = vmatprep.subr.mxu0 %v1579
  %2303 = vmatpush1.msra.mxu0 %v1616
  %2304 = vmatprep.subr.mxu0 %v1575
  %2305 = vmatpush1.msra.mxu0 %v1615
  %2306 = vmatprep.subr.mxu0 %v1479
  %2307 = vmatpush1.msra.mxu0 %v1510
  %2308 = vmatprep.subr.mxu0 %v1475
  %2309 = vmatpush1.msra.mxu0 %v1509
  %2310 = vmatprep.subr.mxu0 %v1471
  %2311 = vmatpush1.msra.mxu0 %v1508
  %2312 = vmatprep.subr.mxu0 %v1467
  %2313 = vmatpush1.msra.mxu0 %v1507
  %2314 = vmatprep.subr.mxu0 %v2111
  %2315 = vmatpush2.msra.mxu0 %v2110
  %2316 = vmatprep.subr.mxu0 %v2106
  %2317 = vmatpush2.msra.mxu0 %v2105
  %2318 = vmatprep.subr.mxu0 %v2101
  %2319 = vmatpush2.msra.mxu0 %v2100
  %2320 = vmatprep.subr.mxu0 %v2096
  %2321 = vmatpush2.msra.mxu0 %v2095
  %2322 = vmatprep.subr.mxu0 %v2007
  %2323 = vmatpush2.msra.mxu0 %v2006
  %2324 = vmatprep.subr.mxu0 %v2002
  %2325 = vmatpush2.msra.mxu0 %v2001
  %2326 = vmatprep.subr.mxu0 %v1997
  %2327 = vmatpush2.msra.mxu0 %v1996
  %2328 = vmatprep.subr.mxu0 %v1992
  %2329 = vmatpush2.msra.mxu0 %v1991
  %2330 = vmatprep.subr.mxu0 %v1899
  %2331 = vmatpush2.msra.mxu0 %v1898
  %2332 = vmatprep.subr.mxu0 %v1894
  %2333 = vmatpush2.msra.mxu0 %v1893
  %2334 = vmatprep.subr.mxu0 %v1889
  %2335 = vmatpush2.msra.mxu0 %v1888
  %2336 = vmatprep.subr.mxu0 %v1884
  %2337 = vmatpush2.msra.mxu0 %v1883
  %2338 = vmatprep.subr.mxu0 %v1372
  %2339 = vmatpush2.msra.mxu0 %v1371
  %2340 = vmatprep.subr.mxu0 %v1366
  %2341 = vmatpush2.msra.mxu0 %v1365
  %2342 = vmatprep.subr.mxu0 %v1360
  %2343 = vmatpush2.msra.mxu0 %v1359
  %2344 = vmatprep.subr.mxu0 %v1354
  %2345 = vmatpush2.msra.mxu0 %v1353
  %2346 = vmatprep.mubr.f32.mxu0 %v2272
  %2347 = vmatmul.mubr.f32.gmra.mxu0 %v2268
  %v2348 = vpop.f32.mrf.mxu0
  %v2349 = vadd.f32 %v2263, %v2348
  %v2350 = vpop.f32.mrf.mxu0
  %v2351 = vadd.f32 %v2263, %v2350
  %2352 = vdwg.mxu0
  %2353 = vmatprep.subr.mxu0 0.0
  %2354 = vmatpush1.msra.mxu0 0.0
  %2355 = vmatprep.subr.mxu0 0.0
  %2356 = vmatpush1.msra.mxu0 0.0
  %2357 = vmatprep.subr.mxu0 0.0
  %2358 = vmatpush1.msra.mxu0 0.0
  %2359 = vmatprep.subr.mxu0 0.0
  %2360 = vmatpush1.msra.mxu0 0.0
  %2361 = vmatprep.subr.mxu0 0.0
  %2362 = vmatpush1.msra.mxu0 0.0
  %2363 = vmatprep.subr.mxu0 0.0
  %2364 = vmatpush1.msra.mxu0 0.0
  %2365 = vmatprep.subr.mxu0 0.0
  %2366 = vmatpush1.msra.mxu0 0.0
  %2367 = vmatprep.subr.mxu0 0.0
  %2368 = vmatpush1.msra.mxu0 0.0
  %2369 = vmatprep.subr.mxu0 0.0
  %2370 = vmatpush1.msra.mxu0 0.0
  %2371 = vmatprep.subr.mxu0 0.0
  %2372 = vmatpush1.msra.mxu0 0.0
  %2373 = vmatprep.subr.mxu0 0.0
  %2374 = vmatpush1.msra.mxu0 0.0
  %2375 = vmatprep.subr.mxu0 0.0
  %2376 = vmatpush1.msra.mxu0 0.0
  %2377 = vmatprep.subr.mxu0 %v2215
  %2378 = vmatpush1.msra.mxu0 %v2214
  %2379 = vmatprep.subr.mxu0 %v2210
  %2380 = vmatpush1.msra.mxu0 %v2209
  %2381 = vmatprep.subr.mxu0 %v2205
  %2382 = vmatpush1.msra.mxu0 %v2204
  %2383 = vmatprep.subr.mxu0 %v2200
  %2384 = vmatpush1.msra.mxu0 %v2199
  %2385 = vmatprep.subr.mxu0 0.0
  %2386 = vmatpush2.msra.mxu0 0.0
  %2387 = vmatprep.subr.mxu0 0.0
  %2388 = vmatpush2.msra.mxu0 0.0
  %2389 = vmatprep.subr.mxu0 0.0
  %2390 = vmatpush2.msra.mxu0 0.0
  %2391 = vmatprep.subr.mxu0 0.0
  %2392 = vmatpush2.msra.mxu0 0.0
  %2393 = vmatprep.subr.mxu0 0.0
  %2394 = vmatpush2.msra.mxu0 0.0
  %2395 = vmatprep.subr.mxu0 0.0
  %2396 = vmatpush2.msra.mxu0 0.0
  %2397 = vmatprep.subr.mxu0 0.0
  %2398 = vmatpush2.msra.mxu0 0.0
  %2399 = vmatprep.subr.mxu0 0.0
  %2400 = vmatpush2.msra.mxu0 0.0
  %2401 = vmatprep.subr.mxu0 0.0
  %2402 = vmatpush2.msra.mxu0 0.0
  %2403 = vmatprep.subr.mxu0 0.0
  %2404 = vmatpush2.msra.mxu0 0.0
  %2405 = vmatprep.subr.mxu0 0.0
  %2406 = vmatpush2.msra.mxu0 0.0
  %2407 = vmatprep.subr.mxu0 0.0
  %2408 = vmatpush2.msra.mxu0 0.0
  %2409 = vmatprep.subr.mxu0 0.0
  %2410 = vmatpush2.msra.mxu0 0.0
  %2411 = vmatprep.subr.mxu0 0.0
  %2412 = vmatpush2.msra.mxu0 0.0
  %2413 = vmatprep.subr.mxu0 0.0
  %2414 = vmatpush2.msra.mxu0 0.0
  %2415 = vmatprep.subr.mxu0 0.0
  %2416 = vmatpush2.msra.mxu0 0.0
  %2417 = vmatprep.mubr.f32.mxu0 0.0
  %2418 = vmatmul.mubr.f32.gmra.mxu0 %v2280
  %v2419 = vpop.f32.mrf.mxu0
  %v2420 = vadd.f32 %v2349, %v2419
  %v2421 = vpop.f32.mrf.mxu0
  %v2422 = vadd.f32 %v2351, %v2421
  %2423 = vdwg.mxu0
  %2424 = vmatprep.subr.mxu0 %v1804
  %2425 = vmatpush1.msra.mxu0 %v1803
  %2426 = vmatprep.subr.mxu0 %v1799
  %2427 = vmatpush1.msra.mxu0 %v1798
  %2428 = vmatprep.subr.mxu0 %v1794
  %2429 = vmatpush1.msra.mxu0 %v1793
  %2430 = vmatprep.subr.mxu0 %v1789
  %2431 = vmatpush1.msra.mxu0 %v1788
  %2432 = vmatprep.subr.mxu0 %v1697
  %2433 = vmatpush1.msra.mxu0 %v1696
  %2434 = vmatprep.subr.mxu0 %v1693
  %2435 = vmatpush1.msra.mxu0 %v1692
  %2436 = vmatprep.subr.mxu0 %v1689
  %2437 = vmatpush1.msra.mxu0 %v1688
  %2438 = vmatprep.subr.mxu0 %v1685
  %2439 = vmatpush1.msra.mxu0 %v1684
  %2440 = vmatprep.subr.mxu0 %v1589
  %2441 = vmatpush1.msra.mxu0 %v1588
  %2442 = vmatprep.subr.mxu0 %v1585
  %2443 = vmatpush1.msra.mxu0 %v1584
  %2444 = vmatprep.subr.mxu0 %v1581
  %2445 = vmatpush1.msra.mxu0 %v1580
  %2446 = vmatprep.subr.mxu0 %v1577
  %2447 = vmatpush1.msra.mxu0 %v1576
  %2448 = vmatprep.subr.mxu0 %v1481
  %2449 = vmatpush1.msra.mxu0 %v1480
  %2450 = vmatprep.subr.mxu0 %v1477
  %2451 = vmatpush1.msra.mxu0 %v1476
  %2452 = vmatprep.subr.mxu0 %v1473
  %2453 = vmatpush1.msra.mxu0 %v1472
  %2454 = vmatprep.subr.mxu0 %v1469
  %2455 = vmatpush1.msra.mxu0 %v1468
  %2456 = vmatprep.subr.mxu0 %v2113
  %2457 = vmatpush2.msra.mxu0 %v2112
  %2458 = vmatprep.subr.mxu0 %v2108
  %2459 = vmatpush2.msra.mxu0 %v2107
  %2460 = vmatprep.subr.mxu0 %v2103
  %2461 = vmatpush2.msra.mxu0 %v2102
  %2462 = vmatprep.subr.mxu0 %v2098
  %2463 = vmatpush2.msra.mxu0 %v2097
  %2464 = vmatprep.subr.mxu0 %v2009
  %2465 = vmatpush2.msra.mxu0 %v2008
  %2466 = vmatprep.subr.mxu0 %v2004
  %2467 = vmatpush2.msra.mxu0 %v2003
  %2468 = vmatprep.subr.mxu0 %v1999
  %2469 = vmatpush2.msra.mxu0 %v1998
  %2470 = vmatprep.subr.mxu0 %v1994
  %2471 = vmatpush2.msra.mxu0 %v1993
  %2472 = vmatprep.subr.mxu0 %v1901
  %2473 = vmatpush2.msra.mxu0 %v1900
  %2474 = vmatprep.subr.mxu0 %v1896
  %2475 = vmatpush2.msra.mxu0 %v1895
  %2476 = vmatprep.subr.mxu0 %v1891
  %2477 = vmatpush2.msra.mxu0 %v1890
  %2478 = vmatprep.subr.mxu0 %v1886
  %2479 = vmatpush2.msra.mxu0 %v1885
  %2480 = vmatprep.subr.mxu0 %v1374
  %2481 = vmatpush2.msra.mxu0 %v1373
  %2482 = vmatprep.subr.mxu0 %v1368
  %2483 = vmatpush2.msra.mxu0 %v1367
  %2484 = vmatprep.subr.mxu0 %v1362
  %2485 = vmatpush2.msra.mxu0 %v1361
  %2486 = vmatprep.subr.mxu0 %v1356
  %2487 = vmatpush2.msra.mxu0 %v1355
  %2488 = vmatprep.mubr.f32.mxu0 %v2272
  %2489 = vmatmul.mubr.f32.gmra.mxu0 %v2268
  %v2490 = vpop.f32.mrf.mxu0
  %v2491 = vadd.f32 %v2263, %v2490
  %v2492 = vpop.f32.mrf.mxu0
  %v2493 = vadd.f32 %v2263, %v2492
  %2494 = vdwg.mxu0
  %2495 = vmatprep.subr.mxu0 0.0
  %2496 = vmatpush1.msra.mxu0 0.0
  %2497 = vmatprep.subr.mxu0 0.0
  %2498 = vmatpush1.msra.mxu0 0.0
  %2499 = vmatprep.subr.mxu0 0.0
  %2500 = vmatpush1.msra.mxu0 0.0
  %2501 = vmatprep.subr.mxu0 0.0
  %2502 = vmatpush1.msra.mxu0 0.0
  %2503 = vmatprep.subr.mxu0 0.0
  %2504 = vmatpush1.msra.mxu0 0.0
  %2505 = vmatprep.subr.mxu0 0.0
  %2506 = vmatpush1.msra.mxu0 0.0
  %2507 = vmatprep.subr.mxu0 0.0
  %2508 = vmatpush1.msra.mxu0 0.0
  %2509 = vmatprep.subr.mxu0 0.0
  %2510 = vmatpush1.msra.mxu0 0.0
  %2511 = vmatprep.subr.mxu0 0.0
  %2512 = vmatpush1.msra.mxu0 0.0
  %2513 = vmatprep.subr.mxu0 0.0
  %2514 = vmatpush1.msra.mxu0 0.0
  %2515 = vmatprep.subr.mxu0 0.0
  %2516 = vmatpush1.msra.mxu0 0.0
  %2517 = vmatprep.subr.mxu0 0.0
  %2518 = vmatpush1.msra.mxu0 0.0
  %2519 = vmatprep.subr.mxu0 %v2217
  %2520 = vmatpush1.msra.mxu0 %v2216
  %2521 = vmatprep.subr.mxu0 %v2212
  %2522 = vmatpush1.msra.mxu0 %v2211
  %2523 = vmatprep.subr.mxu0 %v2207
  %2524 = vmatpush1.msra.mxu0 %v2206
  %2525 = vmatprep.subr.mxu0 %v2202
  %2526 = vmatpush1.msra.mxu0 %v2201
  %2527 = vmatprep.subr.mxu0 0.0
  %2528 = vmatpush2.msra.mxu0 0.0
  %2529 = vmatprep.subr.mxu0 0.0
  %2530 = vmatpush2.msra.mxu0 0.0
  %2531 = vmatprep.subr.mxu0 0.0
  %2532 = vmatpush2.msra.mxu0 0.0
  %2533 = vmatprep.subr.mxu0 0.0
  %2534 = vmatpush2.msra.mxu0 0.0
  %2535 = vmatprep.subr.mxu0 0.0
  %2536 = vmatpush2.msra.mxu0 0.0
  %2537 = vmatprep.subr.mxu0 0.0
  %2538 = vmatpush2.msra.mxu0 0.0
  %2539 = vmatprep.subr.mxu0 0.0
  %2540 = vmatpush2.msra.mxu0 0.0
  %2541 = vmatprep.subr.mxu0 0.0
  %2542 = vmatpush2.msra.mxu0 0.0
  %2543 = vmatprep.subr.mxu0 0.0
  %2544 = vmatpush2.msra.mxu0 0.0
  %2545 = vmatprep.subr.mxu0 0.0
  %2546 = vmatpush2.msra.mxu0 0.0
  %2547 = vmatprep.subr.mxu0 0.0
  %2548 = vmatpush2.msra.mxu0 0.0
  %2549 = vmatprep.subr.mxu0 0.0
  %2550 = vmatpush2.msra.mxu0 0.0
  %2551 = vmatprep.subr.mxu0 0.0
  %2552 = vmatpush2.msra.mxu0 0.0
  %2553 = vmatprep.subr.mxu0 0.0
  %2554 = vmatpush2.msra.mxu0 0.0
  %2555 = vmatprep.subr.mxu0 0.0
  %2556 = vmatpush2.msra.mxu0 0.0
  %2557 = vmatprep.subr.mxu0 0.0
  %2558 = vmatpush2.msra.mxu0 0.0
  %2559 = vmatprep.mubr.f32.mxu0 0.0
  %2560 = vmatmul.mubr.f32.gmra.mxu0 %v2280
  %v2561 = vpop.f32.mrf.mxu0
  %v2562 = vadd.f32 %v2491, %v2561
  %v2563 = vpop.f32.mrf.mxu0
  %v2564 = vadd.f32 %v2493, %v2563
  %2565 = vdwg.mxu0
  %2566 = vmatprep.subr.mxu0 %v1806
  %2567 = vmatpush1.msra.mxu0 %v1805
  %2568 = vmatprep.subr.mxu0 %v1801
  %2569 = vmatpush1.msra.mxu0 %v1800
  %2570 = vmatprep.subr.mxu0 %v1796
  %2571 = vmatpush1.msra.mxu0 %v1795
  %2572 = vmatprep.subr.mxu0 %v1791
  %2573 = vmatpush1.msra.mxu0 %v1790
  %2574 = vmatprep.subr.mxu0 %v1682
  %2575 = vmatpush1.msra.mxu0 %v1698
  %2576 = vmatprep.subr.mxu0 %v1672
  %2577 = vmatpush1.msra.mxu0 %v1694
  %2578 = vmatprep.subr.mxu0 %v1662
  %2579 = vmatpush1.msra.mxu0 %v1690
  %2580 = vmatprep.subr.mxu0 %v1652
  %2581 = vmatpush1.msra.mxu0 %v1686
  %2582 = vmatprep.subr.mxu0 %v1574
  %2583 = vmatpush1.msra.mxu0 %v1590
  %2584 = vmatprep.subr.mxu0 %v1564
  %2585 = vmatpush1.msra.mxu0 %v1586
  %2586 = vmatprep.subr.mxu0 %v1554
  %2587 = vmatpush1.msra.mxu0 %v1582
  %2588 = vmatprep.subr.mxu0 %v1544
  %2589 = vmatpush1.msra.mxu0 %v1578
  %2590 = vmatprep.subr.mxu0 %v1466
  %2591 = vmatpush1.msra.mxu0 %v1482
  %2592 = vmatprep.subr.mxu0 %v1456
  %2593 = vmatpush1.msra.mxu0 %v1478
  %2594 = vmatprep.subr.mxu0 %v1446
  %2595 = vmatpush1.msra.mxu0 %v1474
  %2596 = vmatprep.subr.mxu0 %v1436
  %2597 = vmatpush1.msra.mxu0 %v1470
  %2598 = vmatprep.subr.mxu0 %v2142
  %2599 = vmatpush2.msra.mxu0 %v2150
  %2600 = vmatprep.subr.mxu0 %v2140
  %2601 = vmatpush2.msra.mxu0 %v2149
  %2602 = vmatprep.subr.mxu0 %v2138
  %2603 = vmatpush2.msra.mxu0 %v2148
  %2604 = vmatprep.subr.mxu0 %v2136
  %2605 = vmatpush2.msra.mxu0 %v2147
  %2606 = vmatprep.subr.mxu0 %v2038
  %2607 = vmatpush2.msra.mxu0 %v2046
  %2608 = vmatprep.subr.mxu0 %v2036
  %2609 = vmatpush2.msra.mxu0 %v2045
  %2610 = vmatprep.subr.mxu0 %v2034
  %2611 = vmatpush2.msra.mxu0 %v2044
  %2612 = vmatprep.subr.mxu0 %v2032
  %2613 = vmatpush2.msra.mxu0 %v2043
  %2614 = vmatprep.subr.mxu0 %v1942
  %2615 = vmatpush2.msra.mxu0 %v1902
  %2616 = vmatprep.subr.mxu0 %v1941
  %2617 = vmatpush2.msra.mxu0 %v1897
  %2618 = vmatprep.subr.mxu0 %v1940
  %2619 = vmatpush2.msra.mxu0 %v1892
  %2620 = vmatprep.subr.mxu0 %v1939
  %2621 = vmatpush2.msra.mxu0 %v1887
  %2622 = vmatprep.subr.mxu0 %v1376
  %2623 = vmatpush2.msra.mxu0 %v1375
  %2624 = vmatprep.subr.mxu0 %v1370
  %2625 = vmatpush2.msra.mxu0 %v1369
  %2626 = vmatprep.subr.mxu0 %v1364
  %2627 = vmatpush2.msra.mxu0 %v1363
  %2628 = vmatprep.subr.mxu0 %v1358
  %2629 = vmatpush2.msra.mxu0 %v1357
  %2630 = vmatprep.mubr.f32.mxu0 %v2272
  %2631 = vmatmul.mubr.f32.gmra.mxu0 %v2268
  %v2632 = vpop.f32.mrf.mxu0
  %v2633 = vadd.f32 %v2263, %v2632
  %v2634 = vpop.f32.mrf.mxu0
  %v2635 = vadd.f32 %v2263, %v2634
  %2636 = vdwg.mxu0
  %2637 = vmatprep.subr.mxu0 0.0
  %2638 = vmatpush1.msra.mxu0 0.0
  %2639 = vmatprep.subr.mxu0 0.0
  %2640 = vmatpush1.msra.mxu0 0.0
  %2641 = vmatprep.subr.mxu0 0.0
  %2642 = vmatpush1.msra.mxu0 0.0
  %2643 = vmatprep.subr.mxu0 0.0
  %2644 = vmatpush1.msra.mxu0 0.0
  %2645 = vmatprep.subr.mxu0 0.0
  %2646 = vmatpush1.msra.mxu0 0.0
  %2647 = vmatprep.subr.mxu0 0.0
  %2648 = vmatpush1.msra.mxu0 0.0
  %2649 = vmatprep.subr.mxu0 0.0
  %2650 = vmatpush1.msra.mxu0 0.0
  %2651 = vmatprep.subr.mxu0 0.0
  %2652 = vmatpush1.msra.mxu0 0.0
  %2653 = vmatprep.subr.mxu0 0.0
  %2654 = vmatpush1.msra.mxu0 0.0
  %2655 = vmatprep.subr.mxu0 0.0
  %2656 = vmatpush1.msra.mxu0 0.0
  %2657 = vmatprep.subr.mxu0 0.0
  %2658 = vmatpush1.msra.mxu0 0.0
  %2659 = vmatprep.subr.mxu0 0.0
  %2660 = vmatpush1.msra.mxu0 0.0
  %2661 = vmatprep.subr.mxu0 %v2246
  %2662 = vmatpush1.msra.mxu0 %v2254
  %2663 = vmatprep.subr.mxu0 %v2244
  %2664 = vmatpush1.msra.mxu0 %v2253
  %2665 = vmatprep.subr.mxu0 %v2242
  %2666 = vmatpush1.msra.mxu0 %v2252
  %2667 = vmatprep.subr.mxu0 %v2240
  %2668 = vmatpush1.msra.mxu0 %v2251
  %2669 = vmatprep.subr.mxu0 0.0
  %2670 = vmatpush2.msra.mxu0 0.0
  %2671 = vmatprep.subr.mxu0 0.0
  %2672 = vmatpush2.msra.mxu0 0.0
  %2673 = vmatprep.subr.mxu0 0.0
  %2674 = vmatpush2.msra.mxu0 0.0
  %2675 = vmatprep.subr.mxu0 0.0
  %2676 = vmatpush2.msra.mxu0 0.0
  %2677 = vmatprep.subr.mxu0 0.0
  %2678 = vmatpush2.msra.mxu0 0.0
  %2679 = vmatprep.subr.mxu0 0.0
  %2680 = vmatpush2.msra.mxu0 0.0
  %2681 = vmatprep.subr.mxu0 0.0
  %2682 = vmatpush2.msra.mxu0 0.0
  %2683 = vmatprep.subr.mxu0 0.0
  %2684 = vmatpush2.msra.mxu0 0.0
  %2685 = vmatprep.subr.mxu0 0.0
  %2686 = vmatpush2.msra.mxu0 0.0
  %2687 = vmatprep.subr.mxu0 0.0
  %2688 = vmatpush2.msra.mxu0 0.0
  %2689 = vmatprep.subr.mxu0 0.0
  %2690 = vmatpush2.msra.mxu0 0.0
  %2691 = vmatprep.subr.mxu0 0.0
  %2692 = vmatpush2.msra.mxu0 0.0
  %2693 = vmatprep.subr.mxu0 0.0
  %2694 = vmatpush2.msra.mxu0 0.0
  %2695 = vmatprep.subr.mxu0 0.0
  %2696 = vmatpush2.msra.mxu0 0.0
  %2697 = vmatprep.subr.mxu0 0.0
  %2698 = vmatpush2.msra.mxu0 0.0
  %2699 = vmatprep.subr.mxu0 0.0
  %2700 = vmatpush2.msra.mxu0 0.0
  %2701 = vmatprep.mubr.f32.mxu0 0.0
  %2702 = vmatmul.mubr.f32.gmra.mxu0 %v2280
  %v2703 = vpop.f32.mrf.mxu0
  %v2704 = vadd.f32 %v2633, %v2703
  %v2705 = vpop.f32.mrf.mxu0
  %v2706 = vadd.f32 %v2635, %v2705
  %2707 = vdwg.mxu0
  %v2708 = vxor.u32 %v2420, 2147483648
  %v2709 = vxor.u32 %v2422, 2147483648
  %v2710 = vxor.u32 %v2562, 2147483648
  %v2711 = vxor.u32 %v2564, 2147483648
  %v2712 = vxor.u32 %v2704, 2147483648
  %v2713 = vxor.u32 %v2706, 2147483648
  %v2714 = vmul.f32 %v2708, 1.442695
  %v2715 = vpow.pop %v2714
  %v2716 = vmul.f32 %v2709, 1.442695
  %v2717 = vpow.pop %v2716
  %v2718 = vmul.f32 %v2710, 1.442695
  %v2719 = vpow.pop %v2718
  %v2720 = vmul.f32 %v2711, 1.442695
  %v2721 = vpow.pop %v2720
  %v2722 = vmul.f32 %v2712, 1.442695
  %v2723 = vpow.pop %v2722
  %v2724 = vmul.f32 %v2713, 1.442695
  %v2725 = vpow.pop %v2724
  %v2726 = vadd.f32 %v2715, 1.0
  %v2727 = vadd.f32 %v2717, 1.0
  %v2728 = vadd.f32 %v2719, 1.0
  %v2729 = vadd.f32 %v2721, 1.0
  %v2730 = vadd.f32 %v2723, 1.0
  %v2731 = vadd.f32 %v2725, 1.0
  %v2732 = vrcp.pop %v2726
  %v2733 = vmul.f32 1.0, %v2732
  %v2734 = vrcp.pop %v2727
  %v2735 = vmul.f32 1.0, %v2734
  %v2736 = vrcp.pop %v2728
  %v2737 = vmul.f32 1.0, %v2736
  %v2738 = vrcp.pop %v2729
  %v2739 = vmul.f32 1.0, %v2738
  %v2740 = vrcp.pop %v2730
  %v2741 = vmul.f32 1.0, %v2740
  %v2742 = vrcp.pop %v2731
  %v2743 = vmul.f32 1.0, %v2742
  %v2750 = vcombine.low %v2733, %v2735
  %v2751 = vcombine.low %v2737, %v2739
  %v2752 = vcombine.low %v2741, %v2743
  %v2754 = vunpack.c.l.s4 1966171168
  %v2755 = vunpack.c.0.s8 %v2754
  %v2756 = vlaneseq
  %v2757 = vshrl.u32 %v2756, 7
  %v2758 = vsub.s32 %v2755, %v2757
  %v2759 = vrot.slane %v2750, %v2758
  %v2761 = vunpack.c.l.s4 1966171168
  %v2762 = vunpack.c.0.s8 %v2761
  %v2763 = vlaneseq
  %v2764 = vshrl.u32 %v2763, 7
  %v2765 = vsub.s32 %v2762, %v2764
  %v2766 = vrot.slane %v2751, %v2765
  %v2768 = vunpack.c.l.s4 1966171168
  %v2769 = vunpack.c.0.s8 %v2768
  %v2770 = vlaneseq
  %v2771 = vshrl.u32 %v2770, 7
  %v2772 = vsub.s32 %v2769, %v2771
  %v2773 = vrot.slane %v2752, %v2772
  %v2774 = vcombine.low %v2759, %v2766
  %v2776 = vunpack.c.l.s4 1966171168
  %v2777 = vunpack.c.0.s8 %v2776
  %v2778 = vlaneseq
  %v2779 = vshrl.u32 %v2778, 7
  %v2780 = vsub.s32 %v2777, %v2779
  %v2781 = vrot.slane %v2774, %v2780
  %v2783 = vunpack.c.l.s4 1966171168
  %v2784 = vunpack.c.0.s8 %v2783
  %v2785 = vlaneseq
  %v2786 = vshrl.u32 %v2785, 7
  %v2787 = vsub.s32 %v2784, %v2786
  %v2788 = vrot.slane %v2773, %v2787
  %v2789 = vcombine.low %v2781, %v2788
  %v2791 = vlaneseq
  %vm2792 = vcmp.ge.s32.totalorder %v2791, 0
  %vm2793 = vcmp.lt.s32.totalorder %v2791, 648
  %vm2794 = vmand %vm2792, %vm2793
  %2795 = vst.msk [vmem:[%s8] sm:$0x3f] %vm2794, %v2789
  // Predicated region
  $region34: #{simpler_cnn_forward.1} parent=0 // pred_check
    _
  $region35: #{simpler_cnn_forward.1} parent=0 // pred_check_branch
    %2797 = sbr.rel (0) target = $region37
  $region36: #{simpler_cnn_forward.1} parent=0 // pred_region
    _
  $region37: #{simpler_cnn_forward.1} parent=0 // pred_fallthru
    _
  // Predicated region
  $region38: #{simpler_cnn_forward.1} parent=0 // pred_check
    _
  $region39: #{simpler_cnn_forward.1} parent=0 // pred_check_branch
    %2799 = sbr.rel (0) target = $region41
  $region40: #{simpler_cnn_forward.1} parent=0 // pred_region
    _
  $region41: #{simpler_cnn_forward.1} parent=0 // pred_fallthru
    _

</llo_original>
